<compile_context>
chip_gen: v7x
topology: tpu7x:2x2x1
jax: 0.10.0
libtpu: 0.0.40
codegen_flags: <defaults>
</compile_context>

<pallas_src>
import functools

import jax
import jax.numpy as jnp
from jax.experimental import pallas as pl
from jax.experimental.pallas import tpu as pltpu

EPS = 1e-5             # PyTorch LayerNorm default eps
HEAD_HIDDEN = 64       # actor_fc1 / critic_fc1 width
MAX_ROWS_PER_BLOCK = 1024


def _round_up(v, m):
    return ((v + m - 1) // m) * m


# ---------------- fused Pallas kernel ----------------

def fused_acmodel_kernel(x_ref, w1c_ref, b1p_ref, w2_ref, b2_ref, w3_ref, b3_ref,
                         w1h_ref, v1_ref, w2h_ref, v2_ref, s1_ref, s2_ref,
                         out_ref, *, n_act):
    f32 = jnp.float32
    bf16 = jnp.bfloat16

    x = x_ref[...]                                   # (Bb, H*W*3) bf16
    tap_w = b1p_ref.shape[1]                         # lane-aligned per-tap width

    # --- conv1: all four 2x2/stride-2 maxpool taps in ONE matmul, then tap max,
    #     bias, ReLU (ReLU/max commute; bias is identical across taps) ---
    t_all = jnp.dot(x, w1c_ref[...], preferred_element_type=f32)   # (Bb, 4*tap_w)
    t = jnp.maximum(
        jnp.maximum(t_all[:, 0:tap_w], t_all[:, tap_w:2 * tap_w]),
        jnp.maximum(t_all[:, 2 * tap_w:3 * tap_w], t_all[:, 3 * tap_w:4 * tap_w]))
    y = jnp.maximum(t + b1p_ref[...], 0.0)           # (Bb, tap_w) f32, pads == 0

    # --- conv2 + ReLU (w2 rows zero-padded to tap_w) ---
    y = jnp.maximum(jnp.dot(y.astype(bf16), w2_ref[...], preferred_element_type=f32)
                    + b2_ref[...], 0.0)              # (Bb, h2*w2*32) f32

    # --- conv3 + ReLU (columns pre-ordered to the torch NCHW flatten) ---
    emb = jnp.maximum(jnp.dot(y.astype(bf16), w3_ref[...], preferred_element_type=f32)
                      + b3_ref[...], 0.0)            # (Bb, image_embedding_size) f32

    def layer_norm(v, s_ref, gamma, beta):
        # Per-branch LayerNorm with mean/var computed on the MXU via the
        # block-indicator matrix S (lane-dense result, no XLU reduction).
        mu = jnp.dot(v, s_ref[...], preferred_element_type=f32)
        cen = v - mu
        var = jnp.dot(cen * cen, s_ref[...], preferred_element_type=f32)
        return cen * jax.lax.rsqrt(var + EPS) * gamma + beta

    # --- fused actor|critic fc1 + per-branch LayerNorm + tanh ---
    h = jnp.dot(emb.astype(bf16), w1h_ref[...], preferred_element_type=f32) + v1_ref[0:1, :]
    h = jnp.tanh(layer_norm(h, s1_ref, v1_ref[1:2, :], v1_ref[2:3, :]))

    # --- fused actor|critic fc2 (zero-padded to a full 128-lane output tile)
    #     + per-branch LayerNorm (critic LN(1): centered term is 0 -> beta) ---
    y2 = jnp.dot(h.astype(bf16), w2h_ref[...], preferred_element_type=f32) + v2_ref[0:1, :]
    y2 = layer_norm(y2, s2_ref, v2_ref[1:2, :], v2_ref[2:3, :])

    # --- log_softmax over the actor columns only; value / pad columns pass through ---
    col = jax.lax.broadcasted_iota(jnp.int32, (1, y2.shape[-1]), 1)
    act_mask = col < n_act
    m = jnp.max(jnp.where(act_mask, y2, -1e30), axis=-1, keepdims=True)
    z = y2 - m
    lse = jnp.log(jnp.sum(jnp.where(act_mask, jnp.exp(z), 0.0), axis=-1, keepdims=True))
    out_ref[...] = jnp.where(act_mask, z - lse, y2)   # [log-probs | value | zeros]


# ---------------- wrapper ----------------

def forward(obs_image, params, *, n_act):
    """obs_image: (B, n, m, 3) float32, same data as torch obs.image (NHWC)."""
    B = obs_image.shape[0]
    x_flat = obs_image.astype(jnp.bfloat16).reshape(B, -1)   # contiguous reshape
    in_dim = x_flat.shape[1]
    out_w = params["w2h"].shape[1]                           # 128-lane padded head

    # Block-size choice: big blocks amortize per-step pipeline overhead; for
    # B >= 32 force >= 2 grid programs so v7x's two TensorCores both get work.
    if B >= 32:
        block_b = min(MAX_ROWS_PER_BLOCK, _round_up(pl.cdiv(B, 2), 16))
    else:
        block_b = B
    grid = (pl.cdiv(B, block_b),)

    def rows(i):
        return (i, 0)

    def full(ndim):
        return lambda i: (0,) * ndim

    weight_names = ["w1c", "b1p", "w2", "b2", "w3", "b3",
                    "w1h", "v1", "w2h", "v2", "s1", "s2"]
    weight_specs = [pl.BlockSpec(params[name].shape, full(params[name].ndim))
                    for name in weight_names]

    flops_per_row = 2 * (
        in_dim * params["w1c"].shape[1]
        + params["w2"].shape[0] * params["w2"].shape[1]
        + params["w3"].shape[0] * params["w3"].shape[1]
        + params["w1h"].shape[0] * params["w1h"].shape[1]
        + params["w2h"].shape[0] * params["w2h"].shape[1]
        + 2 * params["s1"].shape[0] * params["s1"].shape[1]
        + 2 * params["s2"].shape[0] * params["s2"].shape[1])
    weight_bytes = sum(int(params[n].size) * params[n].dtype.itemsize
                       for n in weight_names)
    cost = pl.CostEstimate(
        flops=int(B * flops_per_row),
        transcendentals=int(B * 5 * out_w),
        bytes_accessed=int(B * in_dim * 2 + weight_bytes + B * out_w * 4))

    out = pl.pallas_call(
        functools.partial(fused_acmodel_kernel, n_act=n_act),
        out_shape=jax.ShapeDtypeStruct((B, out_w), jnp.float32),
        grid=grid,
        in_specs=[pl.BlockSpec((block_b, in_dim), rows)] + weight_specs,
        out_specs=pl.BlockSpec((block_b, out_w), rows),
        compiler_params=pltpu.CompilerParams(dimension_semantics=("parallel",)),
        cost_estimate=cost,
    )(x_flat, *[params[name] for name in weight_names])

    logits = out[:, :n_act]          # log_softmax output (Categorical logits)
    value = out[:, n_act]            # critic value (squeeze(1))
    return logits, value


# ---------------- parameter prep: fold convs/pool/flatten into matmul operands ----------------

def _conv2x2_as_matmul(w, h_in, w_in, *, channel_major_out=False):
    """w: (2, 2, cin, cout). Dense M with conv2d_valid(x)[b,i,j,o] == (x_flat @ M)[b, col],
    input flattened (h, w, c); output columns ordered (i, j, o) or (o, i, j)."""
    cin, cout = w.shape[2], w.shape[3]
    h_out, w_out = h_in - 1, w_in - 1
    m = jnp.zeros((h_in, w_in, cin, h_out, w_out, cout), jnp.float32)
    for dh in range(2):
        a = (jnp.arange(h_in)[:, None] == jnp.arange(h_out)[None, :] + dh).astype(jnp.float32)
        for dw in range(2):
            b = (jnp.arange(w_in)[:, None] == jnp.arange(w_out)[None, :] + dw).astype(jnp.float32)
            m = m + jnp.einsum("hi,wj,co->hwcijo", a, b, w[dh, dw])
    if channel_major_out:
        m = jnp.transpose(m, (0, 1, 2, 5, 3, 4))   # -> (h, w, c, o, i, j): NCHW flatten
    return m.reshape(h_in * w_in * cin, h_out * w_out * cout)


def _conv2x2_pool_taps_merged(w, h_in, w_in):
    """Four per-tap matrices (maxpool2x2(relu(conv2d(x)+b)) == relu(max_k(x@M_k)+b)),
    each zero-padded to a 128-lane-aligned column width and concatenated along N."""
    cin, cout = w.shape[2], w.shape[3]
    h_c, w_c = h_in - 1, w_in - 1
    h_p, w_p = h_c // 2, w_c // 2
    ncols = h_p * w_p * cout
    tap_w = _round_up(ncols, 128)
    mats = []
    for di in range(2):
        for dj in range(2):
            m = jnp.zeros((h_in, w_in, cin, h_p, w_p, cout), jnp.float32)
            for dh in range(2):
                a = (jnp.arange(h_in)[:, None] ==
                     2 * jnp.arange(h_p)[None, :] + di + dh).astype(jnp.float32)
                for dw in range(2):
                    b = (jnp.arange(w_in)[:, None] ==
                         2 * jnp.arange(w_p)[None, :] + dj + dw).astype(jnp.float32)
                    m = m + jnp.einsum("hp,wq,co->hwcpqo", a, b, w[dh, dw])
            m = m.reshape(h_in * w_in * cin, ncols)
            m = jnp.pad(m, ((0, 0), (0, tap_w - ncols)))
            mats.append(m)
    return jnp.concatenate(mats, axis=1), h_p, w_p, tap_w


def init_model_params(key, n=7, m=7, n_actions=7):
    """Mirrors ACModelLN.__init__ (conv default init, init_params for Linear layers)
    and pre-packs everything for the fused kernel (bf16 matmul operands)."""
    keys = jax.random.split(key, 8)
    ki = iter(keys)

    def conv_init(k, cin, cout):
        fan_in = 2 * 2 * cin
        bound = float(fan_in) ** -0.5
        kw_, kb_ = jax.random.split(k)
        w = jax.random.uniform(kw_, (2, 2, cin, cout), jnp.float32, -bound, bound)
        b = jax.random.uniform(kb_, (cout,), jnp.float32, -bound, bound)
        return w, b

    def linear_init(k, cin, cout):
        # init_params: normal(0,1), each output row L2-normalized, bias = 0
        w = jax.random.normal(k, (cin, cout), jnp.float32)
        w = w / jnp.sqrt(jnp.sum(w ** 2, axis=0, keepdims=True))
        return w, jnp.zeros((cout,), jnp.float32)

    c1_w, c1_b = conv_init(next(ki), 3, 16)
    c2_w, c2_b = conv_init(next(ki), 16, 32)
    c3_w, c3_b = conv_init(next(ki), 32, 64)

    img_emb = ((n - 1) // 2 - 2) * ((m - 1) // 2 - 2) * 64    # image_embedding_size

    aw1, ab1 = linear_init(next(ki), img_emb, HEAD_HIDDEN)
    aw2, ab2 = linear_init(next(ki), HEAD_HIDDEN, n_actions)
    cw1, cb1 = linear_init(next(ki), img_emb, HEAD_HIDDEN)
    cw2, cb2 = linear_init(next(ki), HEAD_HIDDEN, 1)

    ag1 = jnp.ones((HEAD_HIDDEN,), jnp.float32); abt1 = jnp.zeros((HEAD_HIDDEN,), jnp.float32)
    ag2 = jnp.ones((n_actions,), jnp.float32);   abt2 = jnp.zeros((n_actions,), jnp.float32)
    cg1 = jnp.ones((HEAD_HIDDEN,), jnp.float32); cbt1 = jnp.zeros((HEAD_HIDDEN,), jnp.float32)
    cg2 = jnp.ones((1,), jnp.float32);           cbt2 = jnp.zeros((1,), jnp.float32)

    # conv1 + maxpool folded into ONE merged, lane-aligned tap matrix
    w1c, hp, wp, tap_w = _conv2x2_pool_taps_merged(c1_w, n, m)
    b1p = jnp.pad(jnp.tile(c1_b, hp * wp), (0, tap_w - hp * wp * 16)).reshape(1, -1)

    # conv2: contracting rows zero-padded to tap_w (pad activations are exactly 0)
    w2 = _conv2x2_as_matmul(c2_w, hp, wp)
    w2 = jnp.pad(w2, ((0, tap_w - w2.shape[0]), (0, 0)))
    h2, w2sp = hp - 1, wp - 1
    b2 = jnp.tile(c2_b, h2 * w2sp).reshape(1, -1)

    w3 = _conv2x2_as_matmul(c3_w, h2, w2sp, channel_major_out=True)   # NCHW flatten order
    h3, w3sp = h2 - 1, w2sp - 1
    b3 = jnp.repeat(c3_b, h3 * w3sp).reshape(1, -1)
    assert h3 * w3sp * 64 == img_emb

    # fused actor|critic fc1
    head_w = 2 * HEAD_HIDDEN
    w1h = jnp.concatenate([aw1, cw1], axis=1)                         # (emb, 128)
    v1 = jnp.stack([jnp.concatenate([ab1, cb1]),
                    jnp.concatenate([ag1, cg1]),
                    jnp.concatenate([abt1, cbt1])], axis=0)           # (3, 128)
    # branch-mean indicator matrix for the fc1 LayerNorms (mean/var via MXU)
    s1 = jnp.zeros((head_w, head_w), jnp.float32)
    s1 = s1.at[:HEAD_HIDDEN, :HEAD_HIDDEN].set(1.0 / HEAD_HIDDEN)
    s1 = s1.at[HEAD_HIDDEN:, HEAD_HIDDEN:].set(1.0 / HEAD_HIDDEN)

    # fused actor|critic fc2, zero-padded to a full 128-lane output tile
    out_w = _round_up(n_actions + 1, 128)
    w2h = jnp.zeros((head_w, out_w), jnp.float32)
    w2h = w2h.at[:HEAD_HIDDEN, :n_actions].set(aw2)
    w2h = w2h.at[HEAD_HIDDEN:, n_actions:n_actions + 1].set(cw2)      # block diagonal
    def padv(v):
        return jnp.pad(v, (0, out_w - v.shape[0]))
    v2 = jnp.stack([padv(jnp.concatenate([ab2, cb2])),
                    padv(jnp.concatenate([ag2, cg2])),
                    padv(jnp.concatenate([abt2, cbt2]))], axis=0)     # (3, out_w)
    s2 = jnp.zeros((out_w, out_w), jnp.float32)
    s2 = s2.at[:n_actions, :n_actions].set(1.0 / n_actions)
    s2 = s2.at[n_actions, n_actions].set(1.0)                         # critic LN(1)

    bf16 = jnp.bfloat16
    return {
        # bf16 matmul operands (folded 0/1 selection structure is exact in bf16)
        "w1c": w1c.astype(bf16), "w2": w2.astype(bf16), "w3": w3.astype(bf16),
        "w1h": w1h.astype(bf16), "w2h": w2h.astype(bf16),
        # f32 biases / LayerNorm params / indicator matrices (elementwise math stays f32)
        "b1p": b1p, "b2": b2, "b3": b3, "v1": v1, "v2": v2, "s1": s1, "s2": s2,
    }


if __name__ == "__main__":
    key = jax.random.PRNGKey(0)
    k_img, k_par = jax.random.split(key)

    B, H, W = 2, 7, 7          # standard MiniGrid 7x7x3 observation
    n_actions = 7              # standard MiniGrid action space
    obs_image = jax.random.uniform(k_img, (B, H, W, 3), jnp.float32, 0.0, 10.0)
    params = init_model_params(k_par, n=H, m=W, n_actions=n_actions)

    # TODO(synk): use_memory (LSTMCell) and use_text (Embedding+GRU) branches are
    # disabled by default in the module and are not implemented here.
    fwd = jax.jit(forward, static_argnames=("n_act",))
    logits, value = fwd(obs_image, params, n_act=n_actions)
    jax.block_until_ready((logits, value))

    assert logits.shape == (B, n_actions)
    assert value.shape == (B,)
    assert bool(jnp.all(jnp.isfinite(logits))) and bool(jnp.all(jnp.isfinite(value)))
    # log_softmax rows must normalize to 1
    assert bool(jnp.allclose(jnp.sum(jnp.exp(logits), axis=-1), 1.0, atol=1e-3))
    print("KERNEL_OK")
</pallas_src>

<mosaic_0001>
module attributes {stable_mosaic.version = 11 : i64} {
  func.func @fused_acmodel_kernel(%arg0: i32, %arg1: memref<2x147xbf16, #tpu.memory_space<vmem>>, %arg2: memref<147x1024xbf16, #tpu.memory_space<vmem>>, %arg3: memref<1x256xf32, #tpu.memory_space<vmem>>, %arg4: memref<256x128xbf16, #tpu.memory_space<vmem>>, %arg5: memref<1x128xf32, #tpu.memory_space<vmem>>, %arg6: memref<128x64xbf16, #tpu.memory_space<vmem>>, %arg7: memref<1x64xf32, #tpu.memory_space<vmem>>, %arg8: memref<64x128xbf16, #tpu.memory_space<vmem>>, %arg9: memref<3x128xf32, #tpu.memory_space<vmem>>, %arg10: memref<128x128xbf16, #tpu.memory_space<vmem>>, %arg11: memref<3x128xf32, #tpu.memory_space<vmem>>, %arg12: memref<128x128xf32, #tpu.memory_space<vmem>>, %arg13: memref<128x128xf32, #tpu.memory_space<vmem>>, %arg14: memref<2x128xf32, #tpu.memory_space<vmem>>) attributes {dimension_semantics = [#tpu.dimension_semantics<parallel>], iteration_bounds = array<i64: 1>, scalar_prefetch = 0 : i64, scratch_operands = 0 : i64, tpu.core_type = #tpu.core_type<tc>, window_params = [{transform_indices = @transform_0, window_bounds = array<i64: 2, 147>}, {pipeline_mode = #tpu.pipeline_mode<synchronous>, transform_indices = @transform_1, window_bounds = array<i64: 147, 1024>}, {pipeline_mode = #tpu.pipeline_mode<synchronous>, transform_indices = @transform_2, window_bounds = array<i64: 1, 256>}, {pipeline_mode = #tpu.pipeline_mode<synchronous>, transform_indices = @transform_3, window_bounds = array<i64: 256, 128>}, {pipeline_mode = #tpu.pipeline_mode<synchronous>, transform_indices = @transform_4, window_bounds = array<i64: 1, 128>}, {pipeline_mode = #tpu.pipeline_mode<synchronous>, transform_indices = @transform_5, window_bounds = array<i64: 128, 64>}, {pipeline_mode = #tpu.pipeline_mode<synchronous>, transform_indices = @transform_6, window_bounds = array<i64: 1, 64>}, {pipeline_mode = #tpu.pipeline_mode<synchronous>, transform_indices = @transform_7, window_bounds = array<i64: 64, 128>}, {pipeline_mode = #tpu.pipeline_mode<synchronous>, transform_indices = @transform_8, window_bounds = array<i64: 3, 128>}, {pipeline_mode = #tpu.pipeline_mode<synchronous>, transform_indices = @transform_9, window_bounds = array<i64: 128, 128>}, {pipeline_mode = #tpu.pipeline_mode<synchronous>, transform_indices = @transform_10, window_bounds = array<i64: 3, 128>}, {pipeline_mode = #tpu.pipeline_mode<synchronous>, transform_indices = @transform_11, window_bounds = array<i64: 128, 128>}, {pipeline_mode = #tpu.pipeline_mode<synchronous>, transform_indices = @transform_12, window_bounds = array<i64: 128, 128>}, {transform_indices = @transform_13, window_bounds = array<i64: 2, 128>}]} {
    %c0 = arith.constant 0 : index
    %c0_0 = arith.constant 0 : index
    %0 = vector.load %arg1[%c0, %c0_0] : memref<2x147xbf16, #tpu.memory_space<vmem>>, vector<2x147xbf16>
    %c0_1 = arith.constant 0 : index
    %c0_2 = arith.constant 0 : index
    %1 = vector.load %arg2[%c0_1, %c0_2] : memref<147x1024xbf16, #tpu.memory_space<vmem>>, vector<147x1024xbf16>
    %cst = arith.constant dense<0.000000e+00> : vector<2x1024xf32>
    %2 = tpu.matmul %0, %1, %cst {dimension_numbers = #tpu.dot_dimension_numbers<[1], [0], [0], [1], [0, 0, 1, 1], [], []>} : vector<2x147xbf16>, vector<147x1024xbf16>, vector<2x1024xf32> -> vector<2x1024xf32>
    %3 = vector.extract_strided_slice %2 {offsets = [0, 0], sizes = [2, 256], strides = [1, 1]} : vector<2x1024xf32> to vector<2x256xf32>
    %4 = vector.extract_strided_slice %2 {offsets = [0, 256], sizes = [2, 256], strides = [1, 1]} : vector<2x1024xf32> to vector<2x256xf32>
    %5 = arith.maximumf %3, %4 : vector<2x256xf32>
    %6 = vector.extract_strided_slice %2 {offsets = [0, 512], sizes = [2, 256], strides = [1, 1]} : vector<2x1024xf32> to vector<2x256xf32>
    %7 = vector.extract_strided_slice %2 {offsets = [0, 768], sizes = [2, 256], strides = [1, 1]} : vector<2x1024xf32> to vector<2x256xf32>
    %8 = arith.maximumf %6, %7 : vector<2x256xf32>
    %9 = arith.maximumf %5, %8 : vector<2x256xf32>
    %c0_3 = arith.constant 0 : index
    %c0_4 = arith.constant 0 : index
    %10 = vector.load %arg3[%c0_3, %c0_4] : memref<1x256xf32, #tpu.memory_space<vmem>>, vector<1x256xf32>
    %11 = vector.broadcast %10 : vector<1x256xf32> to vector<2x256xf32>
    %12 = arith.addf %9, %11 : vector<2x256xf32>
    %cst_5 = arith.constant 0.000000e+00 : f32
    %13 = vector.broadcast %cst_5 : f32 to vector<2x256xf32>
    %14 = arith.maximumf %12, %13 : vector<2x256xf32>
    %15 = arith.truncf %14 : vector<2x256xf32> to vector<2x256xbf16>
    %c0_6 = arith.constant 0 : index
    %c0_7 = arith.constant 0 : index
    %16 = vector.load %arg4[%c0_6, %c0_7] : memref<256x128xbf16, #tpu.memory_space<vmem>>, vector<256x128xbf16>
    %cst_8 = arith.constant dense<0.000000e+00> : vector<2x128xf32>
    %17 = tpu.matmul %15, %16, %cst_8 {dimension_numbers = #tpu.dot_dimension_numbers<[1], [0], [0], [1], [0, 0, 1, 1], [], []>} : vector<2x256xbf16>, vector<256x128xbf16>, vector<2x128xf32> -> vector<2x128xf32>
    %c0_9 = arith.constant 0 : index
    %c0_10 = arith.constant 0 : index
    %18 = vector.load %arg5[%c0_9, %c0_10] : memref<1x128xf32, #tpu.memory_space<vmem>>, vector<1x128xf32>
    %19 = vector.broadcast %18 : vector<1x128xf32> to vector<2x128xf32>
    %20 = arith.addf %17, %19 : vector<2x128xf32>
    %cst_11 = arith.constant 0.000000e+00 : f32
    %21 = vector.broadcast %cst_11 : f32 to vector<2x128xf32>
    %22 = arith.maximumf %20, %21 : vector<2x128xf32>
    %23 = arith.truncf %22 : vector<2x128xf32> to vector<2x128xbf16>
    %c0_12 = arith.constant 0 : index
    %c0_13 = arith.constant 0 : index
    %24 = vector.load %arg6[%c0_12, %c0_13] : memref<128x64xbf16, #tpu.memory_space<vmem>>, vector<128x64xbf16>
    %cst_14 = arith.constant dense<0.000000e+00> : vector<2x64xf32>
    %25 = tpu.matmul %23, %24, %cst_14 {dimension_numbers = #tpu.dot_dimension_numbers<[1], [0], [0], [1], [0, 0, 1, 1], [], []>} : vector<2x128xbf16>, vector<128x64xbf16>, vector<2x64xf32> -> vector<2x64xf32>
    %c0_15 = arith.constant 0 : index
    %c0_16 = arith.constant 0 : index
    %26 = vector.load %arg7[%c0_15, %c0_16] : memref<1x64xf32, #tpu.memory_space<vmem>>, vector<1x64xf32>
    %27 = vector.broadcast %26 : vector<1x64xf32> to vector<2x64xf32>
    %28 = arith.addf %25, %27 : vector<2x64xf32>
    %cst_17 = arith.constant 0.000000e+00 : f32
    %29 = vector.broadcast %cst_17 : f32 to vector<2x64xf32>
    %30 = arith.maximumf %28, %29 : vector<2x64xf32>
    %31 = arith.truncf %30 : vector<2x64xf32> to vector<2x64xbf16>
    %c0_18 = arith.constant 0 : index
    %c0_19 = arith.constant 0 : index
    %32 = vector.load %arg8[%c0_18, %c0_19] : memref<64x128xbf16, #tpu.memory_space<vmem>>, vector<64x128xbf16>
    %cst_20 = arith.constant dense<0.000000e+00> : vector<2x128xf32>
    %33 = tpu.matmul %31, %32, %cst_20 {dimension_numbers = #tpu.dot_dimension_numbers<[1], [0], [0], [1], [0, 0, 1, 1], [], []>} : vector<2x64xbf16>, vector<64x128xbf16>, vector<2x128xf32> -> vector<2x128xf32>
    %c0_21 = arith.constant 0 : index
    %c0_22 = arith.constant 0 : index
    %34 = vector.load %arg9[%c0_21, %c0_22] : memref<3x128xf32, #tpu.memory_space<vmem>>, vector<1x128xf32>
    %35 = vector.broadcast %34 : vector<1x128xf32> to vector<2x128xf32>
    %36 = arith.addf %33, %35 : vector<2x128xf32>
    %c1 = arith.constant 1 : index
    %c0_23 = arith.constant 0 : index
    %37 = vector.load %arg9[%c1, %c0_23] : memref<3x128xf32, #tpu.memory_space<vmem>>, vector<1x128xf32>
    %c2 = arith.constant 2 : index
    %c0_24 = arith.constant 0 : index
    %38 = vector.load %arg9[%c2, %c0_24] : memref<3x128xf32, #tpu.memory_space<vmem>>, vector<1x128xf32>
    %c0_25 = arith.constant 0 : index
    %c0_26 = arith.constant 0 : index
    %39 = vector.load %arg12[%c0_25, %c0_26] : memref<128x128xf32, #tpu.memory_space<vmem>>, vector<128x128xf32>
    %cst_27 = arith.constant dense<0.000000e+00> : vector<2x128xf32>
    %40 = tpu.matmul %36, %39, %cst_27 {dimension_numbers = #tpu.dot_dimension_numbers<[1], [0], [0], [1], [0, 0, 1, 1], [], []>} : vector<2x128xf32>, vector<128x128xf32>, vector<2x128xf32> -> vector<2x128xf32>
    %41 = arith.subf %36, %40 : vector<2x128xf32>
    %42 = arith.mulf %41, %41 : vector<2x128xf32>
    %c0_28 = arith.constant 0 : index
    %c0_29 = arith.constant 0 : index
    %43 = vector.load %arg12[%c0_28, %c0_29] : memref<128x128xf32, #tpu.memory_space<vmem>>, vector<128x128xf32>
    %cst_30 = arith.constant dense<0.000000e+00> : vector<2x128xf32>
    %44 = tpu.matmul %42, %43, %cst_30 {dimension_numbers = #tpu.dot_dimension_numbers<[1], [0], [0], [1], [0, 0, 1, 1], [], []>} : vector<2x128xf32>, vector<128x128xf32>, vector<2x128xf32> -> vector<2x128xf32>
    %cst_31 = arith.constant 9.99999974E-6 : f32
    %45 = vector.broadcast %cst_31 : f32 to vector<2x128xf32>
    %46 = arith.addf %44, %45 : vector<2x128xf32>
    %47 = math.rsqrt %46 : vector<2x128xf32>
    %48 = arith.mulf %41, %47 : vector<2x128xf32>
    %49 = vector.broadcast %37 : vector<1x128xf32> to vector<2x128xf32>
    %50 = arith.mulf %48, %49 : vector<2x128xf32>
    %51 = vector.broadcast %38 : vector<1x128xf32> to vector<2x128xf32>
    %52 = arith.addf %50, %51 : vector<2x128xf32>
    %53 = math.tanh %52 : vector<2x128xf32>
    %54 = arith.truncf %53 : vector<2x128xf32> to vector<2x128xbf16>
    %c0_32 = arith.constant 0 : index
    %c0_33 = arith.constant 0 : index
    %55 = vector.load %arg10[%c0_32, %c0_33] : memref<128x128xbf16, #tpu.memory_space<vmem>>, vector<128x128xbf16>
    %cst_34 = arith.constant dense<0.000000e+00> : vector<2x128xf32>
    %56 = tpu.matmul %54, %55, %cst_34 {dimension_numbers = #tpu.dot_dimension_numbers<[1], [0], [0], [1], [0, 0, 1, 1], [], []>} : vector<2x128xbf16>, vector<128x128xbf16>, vector<2x128xf32> -> vector<2x128xf32>
    %c0_35 = arith.constant 0 : index
    %c0_36 = arith.constant 0 : index
    %57 = vector.load %arg11[%c0_35, %c0_36] : memref<3x128xf32, #tpu.memory_space<vmem>>, vector<1x128xf32>
    %58 = vector.broadcast %57 : vector<1x128xf32> to vector<2x128xf32>
    %59 = arith.addf %56, %58 : vector<2x128xf32>
    %c1_37 = arith.constant 1 : index
    %c0_38 = arith.constant 0 : index
    %60 = vector.load %arg11[%c1_37, %c0_38] : memref<3x128xf32, #tpu.memory_space<vmem>>, vector<1x128xf32>
    %c2_39 = arith.constant 2 : index
    %c0_40 = arith.constant 0 : index
    %61 = vector.load %arg11[%c2_39, %c0_40] : memref<3x128xf32, #tpu.memory_space<vmem>>, vector<1x128xf32>
    %c0_41 = arith.constant 0 : index
    %c0_42 = arith.constant 0 : index
    %62 = vector.load %arg13[%c0_41, %c0_42] : memref<128x128xf32, #tpu.memory_space<vmem>>, vector<128x128xf32>
    %cst_43 = arith.constant dense<0.000000e+00> : vector<2x128xf32>
    %63 = tpu.matmul %59, %62, %cst_43 {dimension_numbers = #tpu.dot_dimension_numbers<[1], [0], [0], [1], [0, 0, 1, 1], [], []>} : vector<2x128xf32>, vector<128x128xf32>, vector<2x128xf32> -> vector<2x128xf32>
    %64 = arith.subf %59, %63 : vector<2x128xf32>
    %65 = arith.mulf %64, %64 : vector<2x128xf32>
    %c0_44 = arith.constant 0 : index
    %c0_45 = arith.constant 0 : index
    %66 = vector.load %arg13[%c0_44, %c0_45] : memref<128x128xf32, #tpu.memory_space<vmem>>, vector<128x128xf32>
    %cst_46 = arith.constant dense<0.000000e+00> : vector<2x128xf32>
    %67 = tpu.matmul %65, %66, %cst_46 {dimension_numbers = #tpu.dot_dimension_numbers<[1], [0], [0], [1], [0, 0, 1, 1], [], []>} : vector<2x128xf32>, vector<128x128xf32>, vector<2x128xf32> -> vector<2x128xf32>
    %cst_47 = arith.constant 9.99999974E-6 : f32
    %68 = vector.broadcast %cst_47 : f32 to vector<2x128xf32>
    %69 = arith.addf %67, %68 : vector<2x128xf32>
    %70 = math.rsqrt %69 : vector<2x128xf32>
    %71 = arith.mulf %64, %70 : vector<2x128xf32>
    %72 = vector.broadcast %60 : vector<1x128xf32> to vector<2x128xf32>
    %73 = arith.mulf %71, %72 : vector<2x128xf32>
    %74 = vector.broadcast %61 : vector<1x128xf32> to vector<2x128xf32>
    %75 = arith.addf %73, %74 : vector<2x128xf32>
    %76 = tpu.iota {dimensions = array<i32: 1>} : vector<1x128xi32>
    %c7_i32 = arith.constant 7 : i32
    %77 = vector.broadcast %c7_i32 : i32 to vector<1x128xi32>
    %78 = arith.cmpi slt, %76, %77 : vector<1x128xi32>
    %cst_48 = arith.constant -1.000000e+30 : f32
    %79 = vector.shape_cast %78 : vector<1x128xi1> to vector<1x128xi1>
    %80 = vector.broadcast %79 : vector<1x128xi1> to vector<2x128xi1>
    %81 = vector.broadcast %cst_48 : f32 to vector<2x128xf32>
    %82 = arith.select %80, %75, %81 : vector<2x128xi1>, vector<2x128xf32>
    %cst_49 = arith.constant dense<0xFF800000> : vector<2xf32>
    %83 = vector.multi_reduction <maximumf>, %82, %cst_49 [1] : vector<2x128xf32> to vector<2xf32>
    %84 = vector.shape_cast %83 : vector<2xf32> to vector<2x1xf32>
    %85 = vector.broadcast %84 : vector<2x1xf32> to vector<2x128xf32>
    %86 = arith.subf %75, %85 : vector<2x128xf32>
    %87 = math.exp %86 : vector<2x128xf32>
    %cst_50 = arith.constant 0.000000e+00 : f32
    %88 = vector.shape_cast %78 : vector<1x128xi1> to vector<1x128xi1>
    %89 = vector.broadcast %88 : vector<1x128xi1> to vector<2x128xi1>
    %90 = vector.broadcast %cst_50 : f32 to vector<2x128xf32>
    %91 = arith.select %89, %87, %90 : vector<2x128xi1>, vector<2x128xf32>
    %cst_51 = arith.constant dense<0.000000e+00> : vector<2xf32>
    %92 = vector.multi_reduction <add>, %91, %cst_51 [1] : vector<2x128xf32> to vector<2xf32>
    %93 = vector.shape_cast %92 : vector<2xf32> to vector<2x1xf32>
    %94 = math.log %93 : vector<2x1xf32>
    %95 = vector.broadcast %94 : vector<2x1xf32> to vector<2x128xf32>
    %96 = arith.subf %86, %95 : vector<2x128xf32>
    %97 = vector.shape_cast %78 : vector<1x128xi1> to vector<1x128xi1>
    %98 = vector.broadcast %97 : vector<1x128xi1> to vector<2x128xi1>
    %99 = arith.select %98, %96, %75 : vector<2x128xi1>, vector<2x128xf32>
    %c0_52 = arith.constant 0 : index
    %c0_53 = arith.constant 0 : index
    %100 = vector.load %arg14[%c0_52, %c0_53] : memref<2x128xf32, #tpu.memory_space<vmem>>, vector<2x128xf32>
    tpu.vector_store %arg14[%c0_52, %c0_53], %99 {strides = array<i32>} : memref<2x128xf32, #tpu.memory_space<vmem>>, vector<2x128xf32>,
    return
  }
  func.func @transform_0(%arg0: i32) -> (i32, i32) {
    %c0_i32 = arith.constant 0 : i32
    %c0_i32_0 = arith.constant 0 : i32
    return %arg0, %c0_i32 : i32, i32
  }
  func.func @transform_1(%arg0: i32) -> (i32, i32) {
    %c0_i32 = arith.constant 0 : i32
    %c0_i32_0 = arith.constant 0 : i32
    %c0_i32_1 = arith.constant 0 : i32
    return %c0_i32, %c0_i32_0 : i32, i32
  }
  func.func @transform_2(%arg0: i32) -> (i32, i32) {
    %c0_i32 = arith.constant 0 : i32
    %c0_i32_0 = arith.constant 0 : i32
    %c0_i32_1 = arith.constant 0 : i32
    return %c0_i32, %c0_i32_0 : i32, i32
  }
  func.func @transform_3(%arg0: i32) -> (i32, i32) {
    %c0_i32 = arith.constant 0 : i32
    %c0_i32_0 = arith.constant 0 : i32
    %c0_i32_1 = arith.constant 0 : i32
    return %c0_i32, %c0_i32_0 : i32, i32
  }
  func.func @transform_4(%arg0: i32) -> (i32, i32) {
    %c0_i32 = arith.constant 0 : i32
    %c0_i32_0 = arith.constant 0 : i32
    %c0_i32_1 = arith.constant 0 : i32
    return %c0_i32, %c0_i32_0 : i32, i32
  }
  func.func @transform_5(%arg0: i32) -> (i32, i32) {
    %c0_i32 = arith.constant 0 : i32
    %c0_i32_0 = arith.constant 0 : i32
    %c0_i32_1 = arith.constant 0 : i32
    return %c0_i32, %c0_i32_0 : i32, i32
  }
  func.func @transform_6(%arg0: i32) -> (i32, i32) {
    %c0_i32 = arith.constant 0 : i32
    %c0_i32_0 = arith.constant 0 : i32
    %c0_i32_1 = arith.constant 0 : i32
    return %c0_i32, %c0_i32_0 : i32, i32
  }
  func.func @transform_7(%arg0: i32) -> (i32, i32) {
    %c0_i32 = arith.constant 0 : i32
    %c0_i32_0 = arith.constant 0 : i32
    %c0_i32_1 = arith.constant 0 : i32
    return %c0_i32, %c0_i32_0 : i32, i32
  }
  func.func @transform_8(%arg0: i32) -> (i32, i32) {
    %c0_i32 = arith.constant 0 : i32
    %c0_i32_0 = arith.constant 0 : i32
    %c0_i32_1 = arith.constant 0 : i32
    return %c0_i32, %c0_i32_0 : i32, i32
  }
  func.func @transform_9(%arg0: i32) -> (i32, i32) {
    %c0_i32 = arith.constant 0 : i32
    %c0_i32_0 = arith.constant 0 : i32
    %c0_i32_1 = arith.constant 0 : i32
    return %c0_i32, %c0_i32_0 : i32, i32
  }
  func.func @transform_10(%arg0: i32) -> (i32, i32) {
    %c0_i32 = arith.constant 0 : i32
    %c0_i32_0 = arith.constant 0 : i32
    %c0_i32_1 = arith.constant 0 : i32
    return %c0_i32, %c0_i32_0 : i32, i32
  }
  func.func @transform_11(%arg0: i32) -> (i32, i32) {
    %c0_i32 = arith.constant 0 : i32
    %c0_i32_0 = arith.constant 0 : i32
    %c0_i32_1 = arith.constant 0 : i32
    return %c0_i32, %c0_i32_0 : i32, i32
  }
  func.func @transform_12(%arg0: i32) -> (i32, i32) {
    %c0_i32 = arith.constant 0 : i32
    %c0_i32_0 = arith.constant 0 : i32
    %c0_i32_1 = arith.constant 0 : i32
    return %c0_i32, %c0_i32_0 : i32, i32
  }
  func.func @transform_13(%arg0: i32) -> (i32, i32) {
    %c0_i32 = arith.constant 0 : i32
    %c0_i32_0 = arith.constant 0 : i32
    return %arg0, %c0_i32 : i32, i32
  }
}

</mosaic_0001>

<llo_original>
// kernel: forward.1
$region0: #{forward.1}
  #allocation0 [shape = 'u32[]', space=smem, size = 0x4, offset = 0x4, fixed_abs, tag = 'smem constant byte address 0x4 - core index']
  #allocation1 [shape = 'u32[144,128]{1,0:T(1,128)}', space=vmem, size = 0x12000, scoped, tag = 'internal scratch']
  %s0 = inlined_call_operand.vmem [shape: bf16[2,147], index: 0, kind: input, shape index: {}]
  %s1 = inlined_call_operand.hbm [shape: bf16[147,1024], index: 1, kind: input, shape index: {}]
  %s2 = inlined_call_operand.hbm [shape: f32[1,256], index: 2, kind: input, shape index: {}]
  %s3 = inlined_call_operand.vmem [shape: bf16[256,128], index: 3, kind: input, shape index: {}]
  %s4 = inlined_call_operand.hbm [shape: f32[1,128], index: 4, kind: input, shape index: {}]
  %s5 = inlined_call_operand.vmem [shape: bf16[128,64], index: 5, kind: input, shape index: {}]
  %s6 = inlined_call_operand.hbm [shape: f32[1,64], index: 6, kind: input, shape index: {}]
  %s7 = inlined_call_operand.hbm [shape: bf16[64,128], index: 7, kind: input, shape index: {}]
  %s8 = inlined_call_operand.hbm [shape: f32[3,128], index: 8, kind: input, shape index: {}]
  %s9 = inlined_call_operand.vmem [shape: bf16[128,128], index: 9, kind: input, shape index: {}]
  %s10 = inlined_call_operand.hbm [shape: f32[3,128], index: 10, kind: input, shape index: {}]
  %s11 = inlined_call_operand.vmem [shape: f32[128,128], index: 11, kind: input, shape index: {}]
  %s12 = inlined_call_operand.hbm [shape: f32[128,128], index: 12, kind: input, shape index: {}]
  %s13 = inlined_call_operand.vmem [shape: f32[2,128], index: 13, kind: output, shape index: {}]
  %s14 = sld [smem:[#allocation0]]
  $region94: #{forward.1} parent=0
    _
  %s16 = ssub.s32 1, %s14
  %s17 = scalar_select 0, %s16, %s14
  $region1: #{forward.1} parent=0
    #allocation2 [shape = 'u8[311296]{0}', space=vmem, size = 0x4c000, scoped, tag = 'input window, operand 1, single buffered']
    #allocation3 [shape = 's32[1]{0}', space=sflag, size = 0x4, scoped, tag = 'scoped memory for forward.1']
    #allocation4 [shape = 'u8[1024]{0}', space=vmem, size = 0x400, scoped, tag = 'input window, operand 2, single buffered']
    #allocation5 [shape = 's32[1]{0}', space=sflag, size = 0x4, scoped, tag = 'scoped memory for forward.1']
    #allocation6 [shape = 'u8[512]{0}', space=vmem, size = 0x400, scoped, tag = 'input window, operand 4, single buffered']
    #allocation7 [shape = 'u8[512]{0}', space=vmem, size = 0x400, scoped, tag = 'input window, operand 6, single buffered']
    #allocation8 [shape = 's32[1]{0}', space=sflag, size = 0x4, scoped, tag = 'scoped memory for forward.1']
    #allocation9 [shape = 'u8[16384]{0}', space=vmem, size = 0x4000, scoped, tag = 'input window, operand 7, single buffered']
    #allocation10 [shape = 'u8[2048]{0}', space=vmem, size = 0x800, scoped, tag = 'input window, operand 8, single buffered']
    #allocation11 [shape = 's32[1]{0}', space=sflag, size = 0x4, scoped, tag = 'scoped memory for forward.1']
    #allocation12 [shape = 'u8[2048]{0}', space=vmem, size = 0x800, scoped, tag = 'input window, operand 10, single buffered']
    #allocation13 [shape = 'u8[65536]{0}', space=vmem, size = 0x10000, scoped, tag = 'input window, operand 12, single buffered']
    #allocation14 [shape = 's32[1]{0}', space=sflag, size = 0x4, scoped, tag = 'scoped memory for forward.1']
    %18 = vsyncpa [#allocation3], 0
    %19 = vsyncpa [#allocation5], 0
    %20 = vsyncpa [#allocation8], 0
    %21 = vsyncpa [#allocation11], 0
    %22 = vsyncpa [#allocation14], 0
    // Predicated region
    $region2: #{forward.1} parent=1 // pred_check
      _
    $region3: #{forward.1} parent=1 // pred_check_branch
      %24 = sbr.rel (0) target = $region5
    $region4: #{forward.1} parent=1 // pred_region
      _
    $region5: #{forward.1} parent=1 // pred_fallthru
      _
    // Predicated region
    $region6: #{forward.1} parent=1 // pred_check
      _
    $region7: #{forward.1} parent=1 // pred_check_branch
      %26 = sbr.rel (0) target = $region9
    $region8: #{forward.1} parent=1 // pred_region
      %s28 = ssub.s32 9728, 9728
      %29 = vsyncadd [#allocation3], %s28
      %s30 = sshll.u32 [#allocation2], 4
      %s31 = int_to_ptr.vmem [resolvable:$true] %s30
      %36 = dma.hbm_to_vmem [thread:$0]  %s1, 9728, %s31, [#allocation3], 512, 512, 32
    $region9: #{forward.1} parent=1 // pred_fallthru
      _
    // Predicated region
    $region10: #{forward.1} parent=1 // pred_check
      _
    $region11: #{forward.1} parent=1 // pred_check_branch
      %38 = sbr.rel (0) target = $region13
    $region12: #{forward.1} parent=1 // pred_region
      %s40 = ssub.s32 32, 32
      %41 = vsyncadd [#allocation5], %s40
      %s43 = sshll.u32 [#allocation4], 4
      %s44 = int_to_ptr.vmem [resolvable:$true] %s43
      %46 = dma.hbm_to_vmem [thread:$0]  %s2, 32, %s44, [#allocation5]
    $region13: #{forward.1} parent=1 // pred_fallthru
      _
    // Predicated region
    $region14: #{forward.1} parent=1 // pred_check
      _
    $region15: #{forward.1} parent=1 // pred_check_branch
      %48 = sbr.rel (0) target = $region17
    $region16: #{forward.1} parent=1 // pred_region
      _
    $region17: #{forward.1} parent=1 // pred_fallthru
      _
    // Predicated region
    $region18: #{forward.1} parent=1 // pred_check
      _
    $region19: #{forward.1} parent=1 // pred_check_branch
      %50 = sbr.rel (0) target = $region21
    $region20: #{forward.1} parent=1 // pred_region
      %s52 = ssub.s32 16, 16
      %53 = vsyncadd [#allocation5], %s52
      %s55 = sshll.u32 [#allocation6], 4
      %s56 = int_to_ptr.vmem [resolvable:$true] %s55
      %58 = dma.hbm_to_vmem [thread:$0]  %s4, 16, %s56, [#allocation5]
    $region21: #{forward.1} parent=1 // pred_fallthru
      _
    // Predicated region
    $region22: #{forward.1} parent=1 // pred_check
      _
    $region23: #{forward.1} parent=1 // pred_check_branch
      %60 = sbr.rel (0) target = $region25
    $region24: #{forward.1} parent=1 // pred_region
      _
    $region25: #{forward.1} parent=1 // pred_fallthru
      _
    // Predicated region
    $region26: #{forward.1} parent=1 // pred_check
      _
    $region27: #{forward.1} parent=1 // pred_check_branch
      %62 = sbr.rel (0) target = $region29
    $region28: #{forward.1} parent=1 // pred_region
      %s64 = ssub.s32 16, 16
      %65 = vsyncadd [#allocation8], %s64
      %s67 = sshll.u32 [#allocation7], 4
      %s68 = int_to_ptr.vmem [resolvable:$true] %s67
      %70 = dma.hbm_to_vmem [thread:$0]  %s6, 16, %s68, [#allocation8]
    $region29: #{forward.1} parent=1 // pred_fallthru
      _
    // Predicated region
    $region30: #{forward.1} parent=1 // pred_check
      _
    $region31: #{forward.1} parent=1 // pred_check_branch
      %72 = sbr.rel (0) target = $region33
    $region32: #{forward.1} parent=1 // pred_region
      %s74 = ssub.s32 512, 512
      %75 = vsyncadd [#allocation8], %s74
      %s76 = sshll.u32 [#allocation9], 4
      %s77 = int_to_ptr.vmem [resolvable:$true] %s76
      %82 = dma.hbm_to_vmem [thread:$0]  %s7, 512, %s77, [#allocation8], 64, 64, 4
    $region33: #{forward.1} parent=1 // pred_fallthru
      _
    // Predicated region
    $region34: #{forward.1} parent=1 // pred_check
      _
    $region35: #{forward.1} parent=1 // pred_check_branch
      %84 = sbr.rel (0) target = $region37
    $region36: #{forward.1} parent=1 // pred_region
      %s86 = ssub.s32 64, 64
      %87 = vsyncadd [#allocation11], %s86
      %s89 = sshll.u32 [#allocation10], 4
      %s90 = int_to_ptr.vmem [resolvable:$true] %s89
      %92 = dma.hbm_to_vmem [thread:$0]  %s8, 64, %s90, [#allocation11]
    $region37: #{forward.1} parent=1 // pred_fallthru
      _
    // Predicated region
    $region38: #{forward.1} parent=1 // pred_check
      _
    $region39: #{forward.1} parent=1 // pred_check_branch
      %94 = sbr.rel (0) target = $region41
    $region40: #{forward.1} parent=1 // pred_region
      _
    $region41: #{forward.1} parent=1 // pred_fallthru
      _
    // Predicated region
    $region42: #{forward.1} parent=1 // pred_check
      _
    $region43: #{forward.1} parent=1 // pred_check_branch
      %96 = sbr.rel (0) target = $region45
    $region44: #{forward.1} parent=1 // pred_region
      %s98 = ssub.s32 64, 64
      %99 = vsyncadd [#allocation11], %s98
      %s101 = sshll.u32 [#allocation12], 4
      %s102 = int_to_ptr.vmem [resolvable:$true] %s101
      %104 = dma.hbm_to_vmem [thread:$0]  %s10, 64, %s102, [#allocation11]
    $region45: #{forward.1} parent=1 // pred_fallthru
      _
    // Predicated region
    $region46: #{forward.1} parent=1 // pred_check
      _
    $region47: #{forward.1} parent=1 // pred_check_branch
      %106 = sbr.rel (0) target = $region49
    $region48: #{forward.1} parent=1 // pred_region
      _
    $region49: #{forward.1} parent=1 // pred_fallthru
      _
    // Predicated region
    $region50: #{forward.1} parent=1 // pred_check
      _
    $region51: #{forward.1} parent=1 // pred_check_branch
      %108 = sbr.rel (0) target = $region53
    $region52: #{forward.1} parent=1 // pred_region
      %s110 = ssub.s32 2048, 2048
      %111 = vsyncadd [#allocation14], %s110
      %s112 = sshll.u32 [#allocation13], 4
      %s113 = int_to_ptr.vmem [resolvable:$true] %s112
      %118 = dma.hbm_to_vmem [thread:$0]  %s12, 2048, %s113, [#allocation14], 128, 128, 8
    $region53: #{forward.1} parent=1 // pred_fallthru
      _
    // Predicated region
    $region54: #{forward.1} parent=1 // pred_check
      _
    $region55: #{forward.1} parent=1 // pred_check_branch
      %120 = sbr.rel (0) target = $region57
    $region56: #{forward.1} parent=1 // pred_region
      %121 = dma.done [#allocation3], 9728
    $region57: #{forward.1} parent=1 // pred_fallthru
      _
    // Predicated region
    $region58: #{forward.1} parent=1 // pred_check
      _
    $region59: #{forward.1} parent=1 // pred_check_branch
      %123 = sbr.rel (0) target = $region61
    $region60: #{forward.1} parent=1 // pred_region
      %124 = dma.done [#allocation5], 32
    $region61: #{forward.1} parent=1 // pred_fallthru
      _
    // Predicated region
    $region62: #{forward.1} parent=1 // pred_check
      _
    $region63: #{forward.1} parent=1 // pred_check_branch
      %126 = sbr.rel (0) target = $region65
    $region64: #{forward.1} parent=1 // pred_region
      %127 = dma.done [#allocation5], 16
    $region65: #{forward.1} parent=1 // pred_fallthru
      _
    // Predicated region
    $region66: #{forward.1} parent=1 // pred_check
      _
    $region67: #{forward.1} parent=1 // pred_check_branch
      %129 = sbr.rel (0) target = $region69
    $region68: #{forward.1} parent=1 // pred_region
      %130 = dma.done [#allocation8], 16
    $region69: #{forward.1} parent=1 // pred_fallthru
      _
    // Predicated region
    $region70: #{forward.1} parent=1 // pred_check
      _
    $region71: #{forward.1} parent=1 // pred_check_branch
      %132 = sbr.rel (0) target = $region73
    $region72: #{forward.1} parent=1 // pred_region
      %133 = dma.done [#allocation8], 512
    $region73: #{forward.1} parent=1 // pred_fallthru
      _
    // Predicated region
    $region74: #{forward.1} parent=1 // pred_check
      _
    $region75: #{forward.1} parent=1 // pred_check_branch
      %135 = sbr.rel (0) target = $region77
    $region76: #{forward.1} parent=1 // pred_region
      %136 = dma.done [#allocation11], 64
    $region77: #{forward.1} parent=1 // pred_fallthru
      _
    // Predicated region
    $region78: #{forward.1} parent=1 // pred_check
      _
    $region79: #{forward.1} parent=1 // pred_check_branch
      %138 = sbr.rel (0) target = $region81
    $region80: #{forward.1} parent=1 // pred_region
      %139 = dma.done [#allocation11], 64
    $region81: #{forward.1} parent=1 // pred_fallthru
      _
    // Predicated region
    $region82: #{forward.1} parent=1 // pred_check
      _
    $region83: #{forward.1} parent=1 // pred_check_branch
      %141 = sbr.rel (0) target = $region85
    $region84: #{forward.1} parent=1 // pred_region
      %142 = dma.done [#allocation14], 2048
    $region85: #{forward.1} parent=1 // pred_fallthru
      _
    %v144 = vld [vmem:[%s0] sm:$0x3]
    %v145 = vld [vmem:[#allocation2] sm:$0xff]
    %v146 = vld [vmem:[#allocation2 + $0x8] sm:$0xff]
    %v147 = vld [vmem:[#allocation2 + $0x10] sm:$0xff]
    %v148 = vld [vmem:[#allocation2 + $0x18] sm:$0xff]
    %v149 = vld [vmem:[#allocation2 + $0x20] sm:$0xff]
    %v150 = vld [vmem:[#allocation2 + $0x28] sm:$0xff]
    %v151 = vld [vmem:[#allocation2 + $0x30] sm:$0xff]
    %v152 = vld [vmem:[#allocation2 + $0x38] sm:$0xff]
    %v153 = vld [vmem:[#allocation2 + $0x40] sm:$0xff]
    %v154 = vld [vmem:[#allocation2 + $0x48] sm:$0xff]
    %v155 = vld [vmem:[#allocation2 + $0x50] sm:$0xff]
    %v156 = vld [vmem:[#allocation2 + $0x58] sm:$0xff]
    %v157 = vld [vmem:[#allocation2 + $0x60] sm:$0xff]
    %v158 = vld [vmem:[#allocation2 + $0x68] sm:$0xff]
    %v159 = vld [vmem:[#allocation2 + $0x70] sm:$0xff]
    %v160 = vld [vmem:[#allocation2 + $0x78] sm:$0xff]
    %v161 = vld [vmem:[#allocation2 + $0x80] sm:$0xff]
    %v162 = vld [vmem:[#allocation2 + $0x88] sm:$0xff]
    %v163 = vld [vmem:[#allocation2 + $0x90] sm:$0xff]
    %v164 = vld [vmem:[#allocation2 + $0x98] sm:$0xff]
    %v165 = vld [vmem:[#allocation2 + $0xa0] sm:$0xff]
    %v166 = vld [vmem:[#allocation2 + $0xa8] sm:$0xff]
    %v167 = vld [vmem:[#allocation2 + $0xb0] sm:$0xff]
    %v168 = vld [vmem:[#allocation2 + $0xb8] sm:$0xff]
    %v169 = vld [vmem:[#allocation2 + $0xc0] sm:$0xff]
    %v170 = vld [vmem:[#allocation2 + $0xc8] sm:$0xff]
    %v171 = vld [vmem:[#allocation2 + $0xd0] sm:$0xff]
    %v172 = vld [vmem:[#allocation2 + $0xd8] sm:$0xff]
    %v173 = vld [vmem:[#allocation2 + $0xe0] sm:$0xff]
    %v174 = vld [vmem:[#allocation2 + $0xe8] sm:$0xff]
    %v175 = vld [vmem:[#allocation2 + $0xf0] sm:$0xff]
    %v176 = vld [vmem:[#allocation2 + $0xf8] sm:$0xff]
    %v177 = vld [vmem:[#allocation2 + $0x100] sm:$0xff]
    %v178 = vld [vmem:[#allocation2 + $0x108] sm:$0xff]
    %v179 = vld [vmem:[#allocation2 + $0x110] sm:$0xff]
    %v180 = vld [vmem:[#allocation2 + $0x118] sm:$0xff]
    %v181 = vld [vmem:[#allocation2 + $0x120] sm:$0xff]
    %v182 = vld [vmem:[#allocation2 + $0x128] sm:$0xff]
    %v183 = vld [vmem:[#allocation2 + $0x130] sm:$0xff]
    %v184 = vld [vmem:[#allocation2 + $0x138] sm:$0xff]
    %v185 = vld [vmem:[#allocation2 + $0x140] sm:$0xff]
    %v186 = vld [vmem:[#allocation2 + $0x148] sm:$0xff]
    %v187 = vld [vmem:[#allocation2 + $0x150] sm:$0xff]
    %v188 = vld [vmem:[#allocation2 + $0x158] sm:$0xff]
    %v189 = vld [vmem:[#allocation2 + $0x160] sm:$0xff]
    %v190 = vld [vmem:[#allocation2 + $0x168] sm:$0xff]
    %v191 = vld [vmem:[#allocation2 + $0x170] sm:$0xff]
    %v192 = vld [vmem:[#allocation2 + $0x178] sm:$0xff]
    %v193 = vld [vmem:[#allocation2 + $0x180] sm:$0xff]
    %v194 = vld [vmem:[#allocation2 + $0x188] sm:$0xff]
    %v195 = vld [vmem:[#allocation2 + $0x190] sm:$0xff]
    %v196 = vld [vmem:[#allocation2 + $0x198] sm:$0xff]
    %v197 = vld [vmem:[#allocation2 + $0x1a0] sm:$0xff]
    %v198 = vld [vmem:[#allocation2 + $0x1a8] sm:$0xff]
    %v199 = vld [vmem:[#allocation2 + $0x1b0] sm:$0xff]
    %v200 = vld [vmem:[#allocation2 + $0x1b8] sm:$0xff]
    %v201 = vld [vmem:[#allocation2 + $0x1c0] sm:$0xff]
    %v202 = vld [vmem:[#allocation2 + $0x1c8] sm:$0xff]
    %v203 = vld [vmem:[#allocation2 + $0x1d0] sm:$0xff]
    %v204 = vld [vmem:[#allocation2 + $0x1d8] sm:$0xff]
    %v205 = vld [vmem:[#allocation2 + $0x1e0] sm:$0xff]
    %v206 = vld [vmem:[#allocation2 + $0x1e8] sm:$0xff]
    %v207 = vld [vmem:[#allocation2 + $0x1f0] sm:$0xff]
    %v208 = vld [vmem:[#allocation2 + $0x1f8] sm:$0xff]
    %v209 = vld [vmem:[#allocation2 + $0x200] sm:$0xff]
    %v210 = vld [vmem:[#allocation2 + $0x208] sm:$0xff]
    %v211 = vld [vmem:[#allocation2 + $0x210] sm:$0xff]
    %v212 = vld [vmem:[#allocation2 + $0x218] sm:$0xff]
    %v213 = vld [vmem:[#allocation2 + $0x220] sm:$0xff]
    %v214 = vld [vmem:[#allocation2 + $0x228] sm:$0xff]
    %v215 = vld [vmem:[#allocation2 + $0x230] sm:$0xff]
    %v216 = vld [vmem:[#allocation2 + $0x238] sm:$0xff]
    %v217 = vld [vmem:[#allocation2 + $0x240] sm:$0x33]
    %v218 = vld [vmem:[#allocation2 + $0x248] sm:$0x33]
    %v219 = vld [vmem:[#allocation2 + $0x250] sm:$0x33]
    %v220 = vld [vmem:[#allocation2 + $0x258] sm:$0x33]
    %v223 = vunpack.c.l.s4 1966171168
    %v224 = vunpack.c.0.s8 %v223
    %v225 = vlaneseq
    %v226 = vshrl.u32 %v225, 7
    %v227 = vsub.s32 %v224, %v226
    %v228 = vrot.slane %v144, %v227
    %v229 = vcombine.high %v228, %v228
    %v231 = vunpack.c.l.s4 1966171168
    %v232 = vunpack.c.0.s8 %v231
    %v233 = vlaneseq
    %v234 = vshrl.u32 %v233, 7
    %v235 = vsub.s32 %v232, %v234
    %v236 = vrot.slane %v228, %v235
    %v238 = vunpack.c.l.s4 1966171168
    %v239 = vunpack.c.0.s8 %v238
    %v240 = vlaneseq
    %v241 = vshrl.u32 %v240, 7
    %v242 = vsub.s32 %v239, %v241
    %v243 = vrot.slane %v229, %v242
    %v321 = vunpack.c.l.b16 %v145
    %v322 = vunpack.c.h.b16 %v145
    %v323 = vunpack.c.l.b16 %v146
    %v324 = vunpack.c.h.b16 %v146
    %v325 = vunpack.c.l.b16 %v147
    %v326 = vunpack.c.h.b16 %v147
    %v327 = vunpack.c.l.b16 %v148
    %v328 = vunpack.c.h.b16 %v148
    %v329 = vunpack.c.l.b16 %v149
    %v330 = vunpack.c.h.b16 %v149
    %v331 = vunpack.c.l.b16 %v150
    %v332 = vunpack.c.h.b16 %v150
    %v333 = vunpack.c.l.b16 %v151
    %v334 = vunpack.c.h.b16 %v151
    %v335 = vunpack.c.l.b16 %v152
    %v336 = vunpack.c.h.b16 %v152
    %v337 = vunpack.c.l.b16 %v153
    %v338 = vunpack.c.h.b16 %v153
    %v339 = vunpack.c.l.b16 %v154
    %v340 = vunpack.c.h.b16 %v154
    %v341 = vunpack.c.l.b16 %v155
    %v342 = vunpack.c.h.b16 %v155
    %v343 = vunpack.c.l.b16 %v156
    %v344 = vunpack.c.h.b16 %v156
    %v345 = vunpack.c.l.b16 %v157
    %v346 = vunpack.c.h.b16 %v157
    %v347 = vunpack.c.l.b16 %v158
    %v348 = vunpack.c.h.b16 %v158
    %v349 = vunpack.c.l.b16 %v159
    %v350 = vunpack.c.h.b16 %v159
    %v351 = vunpack.c.l.b16 %v160
    %v352 = vunpack.c.h.b16 %v160
    %v353 = vunpack.c.l.b16 %v161
    %v354 = vunpack.c.h.b16 %v161
    %v355 = vunpack.c.l.b16 %v162
    %v356 = vunpack.c.h.b16 %v162
    %v357 = vunpack.c.l.b16 %v163
    %v358 = vunpack.c.h.b16 %v163
    %v359 = vunpack.c.l.b16 %v164
    %v360 = vunpack.c.h.b16 %v164
    %v361 = vunpack.c.l.b16 %v165
    %v362 = vunpack.c.h.b16 %v165
    %v363 = vunpack.c.l.b16 %v166
    %v364 = vunpack.c.h.b16 %v166
    %v365 = vunpack.c.l.b16 %v167
    %v366 = vunpack.c.h.b16 %v167
    %v367 = vunpack.c.l.b16 %v168
    %v368 = vunpack.c.h.b16 %v168
    %v369 = vunpack.c.l.b16 %v169
    %v370 = vunpack.c.h.b16 %v169
    %v371 = vunpack.c.l.b16 %v170
    %v372 = vunpack.c.h.b16 %v170
    %v373 = vunpack.c.l.b16 %v171
    %v374 = vunpack.c.h.b16 %v171
    %v375 = vunpack.c.l.b16 %v172
    %v376 = vunpack.c.h.b16 %v172
    %v377 = vunpack.c.l.b16 %v173
    %v378 = vunpack.c.h.b16 %v173
    %v379 = vunpack.c.l.b16 %v174
    %v380 = vunpack.c.h.b16 %v174
    %v381 = vunpack.c.l.b16 %v175
    %v382 = vunpack.c.h.b16 %v175
    %v383 = vunpack.c.l.b16 %v176
    %v384 = vunpack.c.h.b16 %v176
    %v385 = vunpack.c.l.b16 %v177
    %v386 = vunpack.c.h.b16 %v177
    %v387 = vunpack.c.l.b16 %v178
    %v388 = vunpack.c.h.b16 %v178
    %v389 = vunpack.c.l.b16 %v179
    %v390 = vunpack.c.h.b16 %v179
    %v391 = vunpack.c.l.b16 %v180
    %v392 = vunpack.c.h.b16 %v180
    %v393 = vunpack.c.l.b16 %v181
    %v394 = vunpack.c.h.b16 %v181
    %v395 = vunpack.c.l.b16 %v182
    %v396 = vunpack.c.h.b16 %v182
    %v397 = vunpack.c.l.b16 %v183
    %v398 = vunpack.c.h.b16 %v183
    %v399 = vunpack.c.l.b16 %v184
    %v400 = vunpack.c.h.b16 %v184
    %v401 = vunpack.c.l.b16 %v185
    %v402 = vunpack.c.h.b16 %v185
    %v403 = vunpack.c.l.b16 %v186
    %v404 = vunpack.c.h.b16 %v186
    %v405 = vunpack.c.l.b16 %v187
    %v406 = vunpack.c.h.b16 %v187
    %v407 = vunpack.c.l.b16 %v188
    %v408 = vunpack.c.h.b16 %v188
    %v409 = vunpack.c.l.b16 %v189
    %v410 = vunpack.c.h.b16 %v189
    %v411 = vunpack.c.l.b16 %v190
    %v412 = vunpack.c.h.b16 %v190
    %v413 = vunpack.c.l.b16 %v191
    %v414 = vunpack.c.h.b16 %v191
    %v415 = vunpack.c.l.b16 %v192
    %v416 = vunpack.c.h.b16 %v192
    %v417 = vunpack.c.l.b16 %v193
    %v418 = vunpack.c.h.b16 %v193
    %v419 = vunpack.c.l.b16 %v194
    %v420 = vunpack.c.h.b16 %v194
    %v421 = vunpack.c.l.b16 %v195
    %v422 = vunpack.c.h.b16 %v195
    %v423 = vunpack.c.l.b16 %v196
    %v424 = vunpack.c.h.b16 %v196
    %v425 = vunpack.c.l.b16 %v197
    %v426 = vunpack.c.h.b16 %v197
    %v427 = vunpack.c.l.b16 %v198
    %v428 = vunpack.c.h.b16 %v198
    %v429 = vunpack.c.l.b16 %v199
    %v430 = vunpack.c.h.b16 %v199
    %v431 = vunpack.c.l.b16 %v200
    %v432 = vunpack.c.h.b16 %v200
    %v433 = vunpack.c.l.b16 %v201
    %v434 = vunpack.c.h.b16 %v201
    %v435 = vunpack.c.l.b16 %v202
    %v436 = vunpack.c.h.b16 %v202
    %v437 = vunpack.c.l.b16 %v203
    %v438 = vunpack.c.h.b16 %v203
    %v439 = vunpack.c.l.b16 %v204
    %v440 = vunpack.c.h.b16 %v204
    %v441 = vunpack.c.l.b16 %v205
    %v442 = vunpack.c.h.b16 %v205
    %v443 = vunpack.c.l.b16 %v206
    %v444 = vunpack.c.h.b16 %v206
    %v445 = vunpack.c.l.b16 %v207
    %v446 = vunpack.c.h.b16 %v207
    %v447 = vunpack.c.l.b16 %v208
    %v448 = vunpack.c.h.b16 %v208
    %v449 = vunpack.c.l.b16 %v209
    %v450 = vunpack.c.h.b16 %v209
    %v451 = vunpack.c.l.b16 %v210
    %v452 = vunpack.c.h.b16 %v210
    %v453 = vunpack.c.l.b16 %v211
    %v454 = vunpack.c.h.b16 %v211
    %v455 = vunpack.c.l.b16 %v212
    %v456 = vunpack.c.h.b16 %v212
    %v457 = vunpack.c.l.b16 %v213
    %v458 = vunpack.c.h.b16 %v213
    %v459 = vunpack.c.l.b16 %v214
    %v460 = vunpack.c.h.b16 %v214
    %v461 = vunpack.c.l.b16 %v215
    %v462 = vunpack.c.h.b16 %v215
    %v463 = vunpack.c.l.b16 %v216
    %v464 = vunpack.c.h.b16 %v216
    %v465 = vunpack.c.l.b16 %v217
    %v466 = vunpack.c.h.b16 %v217
    %v467 = vunpack.c.l.b16 %v218
    %v468 = vunpack.c.h.b16 %v218
    %v469 = vunpack.c.l.b16 %v219
    %v470 = vunpack.c.h.b16 %v219
    %v471 = vunpack.c.l.b16 %v220
    %v472 = vunpack.c.h.b16 %v220
    %v473 = vpack.c.b16 %v329, %v321
    %v474 = vpack.c.b16 %v330, %v322
    %v475 = vpack.c.b16 %v331, %v323
    %v476 = vpack.c.b16 %v332, %v324
    %v477 = vpack.c.b16 %v333, %v325
    %v478 = vpack.c.b16 %v334, %v326
    %v479 = vpack.c.b16 %v335, %v327
    %v480 = vpack.c.b16 %v336, %v328
    %v481 = vpack.c.b16 %v345, %v337
    %v482 = vpack.c.b16 %v346, %v338
    %v483 = vpack.c.b16 %v347, %v339
    %v484 = vpack.c.b16 %v348, %v340
    %v485 = vpack.c.b16 %v349, %v341
    %v486 = vpack.c.b16 %v350, %v342
    %v487 = vpack.c.b16 %v351, %v343
    %v488 = vpack.c.b16 %v352, %v344
    %v489 = vpack.c.b16 %v361, %v353
    %v490 = vpack.c.b16 %v362, %v354
    %v491 = vpack.c.b16 %v363, %v355
    %v492 = vpack.c.b16 %v364, %v356
    %v493 = vpack.c.b16 %v365, %v357
    %v494 = vpack.c.b16 %v366, %v358
    %v495 = vpack.c.b16 %v367, %v359
    %v496 = vpack.c.b16 %v368, %v360
    %v497 = vpack.c.b16 %v377, %v369
    %v498 = vpack.c.b16 %v378, %v370
    %v499 = vpack.c.b16 %v379, %v371
    %v500 = vpack.c.b16 %v380, %v372
    %v501 = vpack.c.b16 %v381, %v373
    %v502 = vpack.c.b16 %v382, %v374
    %v503 = vpack.c.b16 %v383, %v375
    %v504 = vpack.c.b16 %v384, %v376
    %v505 = vpack.c.b16 %v393, %v385
    %v506 = vpack.c.b16 %v394, %v386
    %v507 = vpack.c.b16 %v395, %v387
    %v508 = vpack.c.b16 %v396, %v388
    %v509 = vpack.c.b16 %v397, %v389
    %v510 = vpack.c.b16 %v398, %v390
    %v511 = vpack.c.b16 %v399, %v391
    %v512 = vpack.c.b16 %v400, %v392
    %v513 = vpack.c.b16 %v409, %v401
    %v514 = vpack.c.b16 %v410, %v402
    %v515 = vpack.c.b16 %v411, %v403
    %v516 = vpack.c.b16 %v412, %v404
    %v517 = vpack.c.b16 %v413, %v405
    %v518 = vpack.c.b16 %v414, %v406
    %v519 = vpack.c.b16 %v415, %v407
    %v520 = vpack.c.b16 %v416, %v408
    %v521 = vpack.c.b16 %v425, %v417
    %v522 = vpack.c.b16 %v426, %v418
    %v523 = vpack.c.b16 %v427, %v419
    %v524 = vpack.c.b16 %v428, %v420
    %v525 = vpack.c.b16 %v429, %v421
    %v526 = vpack.c.b16 %v430, %v422
    %v527 = vpack.c.b16 %v431, %v423
    %v528 = vpack.c.b16 %v432, %v424
    %v529 = vpack.c.b16 %v441, %v433
    %v530 = vpack.c.b16 %v442, %v434
    %v531 = vpack.c.b16 %v443, %v435
    %v532 = vpack.c.b16 %v444, %v436
    %v533 = vpack.c.b16 %v445, %v437
    %v534 = vpack.c.b16 %v446, %v438
    %v535 = vpack.c.b16 %v447, %v439
    %v536 = vpack.c.b16 %v448, %v440
    %v537 = vpack.c.b16 %v457, %v449
    %v538 = vpack.c.b16 %v458, %v450
    %v539 = vpack.c.b16 %v459, %v451
    %v540 = vpack.c.b16 %v460, %v452
    %v541 = vpack.c.b16 %v461, %v453
    %v542 = vpack.c.b16 %v462, %v454
    %v543 = vpack.c.b16 %v463, %v455
    %v544 = vpack.c.b16 %v464, %v456
    %v545 = vpack.c.b16 %v465, %v465
    %v546 = vpack.c.b16 %v466, %v466
    %v547 = vpack.c.b16 %v467, %v467
    %v548 = vpack.c.b16 %v468, %v468
    %v549 = vpack.c.b16 %v469, %v469
    %v550 = vpack.c.b16 %v470, %v470
    %v551 = vpack.c.b16 %v471, %v471
    %v552 = vpack.c.b16 %v472, %v472
    %vm625 = vcmask 154624
    %v627 = vsel %vm625, %v243, 0
    %vm629 = vcmask 1040384
    %vm630 = vcmask 1041408
    %v631 = vsel %vm629, 4294967295, 65535
    %v632 = vsel %vm630, %v631, 0
    %v634 = vand.u32 %v545, %v632
    %v637 = vand.u32 %v546, %v632
    %v640 = vand.u32 %v547, %v632
    %v643 = vand.u32 %v548, %v632
    %v646 = vand.u32 %v549, %v632
    %v649 = vand.u32 %v550, %v632
    %v652 = vand.u32 %v551, %v632
    %v655 = vand.u32 %v552, %v632
    %657 = vmatprep.subr.bf16.mxu0 %v474
    %658 = vmatpush1.bf16.msra.mxu0 %v473
    %659 = vmatprep.subr.bf16.mxu0 %v482
    %660 = vmatpush1.bf16.msra.mxu0 %v481
    %661 = vmatprep.subr.bf16.mxu0 %v490
    %662 = vmatpush1.bf16.msra.mxu0 %v489
    %663 = vmatprep.subr.bf16.mxu0 %v498
    %664 = vmatpush1.bf16.msra.mxu0 %v497
    %665 = vmatprep.subr.bf16.mxu0 %v506
    %666 = vmatpush1.bf16.msra.mxu0 %v505
    %667 = vmatprep.subr.bf16.mxu0 %v514
    %668 = vmatpush1.bf16.msra.mxu0 %v513
    %669 = vmatprep.subr.bf16.mxu0 %v522
    %670 = vmatpush1.bf16.msra.mxu0 %v521
    %671 = vmatprep.subr.bf16.mxu0 %v530
    %672 = vmatpush1.bf16.msra.mxu0 %v529
    %673 = vmatprep.subr.bf16.mxu0 %v538
    %674 = vmatpush1.bf16.msra.mxu0 %v537
    %675 = vmatprep.subr.bf16.mxu0 %v637
    %676 = vmatpush1.bf16.msra.mxu0 %v634
    %677 = vmatprep.subr.bf16.mxu0 0
    %678 = vmatpush1.bf16.msra.mxu0 0
    %679 = vmatprep.subr.bf16.mxu0 0
    %680 = vmatpush1.bf16.msra.mxu0 0
    %681 = vmatprep.subr.bf16.mxu0 0
    %682 = vmatpush1.bf16.msra.mxu0 0
    %683 = vmatprep.subr.bf16.mxu0 0
    %684 = vmatpush1.bf16.msra.mxu0 0
    %685 = vmatprep.subr.bf16.mxu0 0
    %686 = vmatpush1.bf16.msra.mxu0 0
    %687 = vmatprep.subr.bf16.mxu0 0
    %688 = vmatpush1.bf16.msra.mxu0 0
    %689 = vmatprep.mubr.bf16.mxu0 %v627
    %690 = vmatmul.mubr.bf16.gmra.mrb[0].mxu0 %v236
    %v691 = vpop.f32.mrb[0].mxu0
    %v692 = vadd.f32 0.0, %v691
    %v693 = vpop.f32.mrb[0].mxu0
    %v694 = vadd.f32 0.0, %v693
    %v695 = vpop.f32.mrb[0].mxu0
    %v696 = vpop.f32.mrb[0].mxu0
    %697 = vdwg.mxu0
    %698 = vmatprep.subr.bf16.mxu0 %v476
    %699 = vmatpush1.bf16.msra.mxu0 %v475
    %700 = vmatprep.subr.bf16.mxu0 %v484
    %701 = vmatpush1.bf16.msra.mxu0 %v483
    %702 = vmatprep.subr.bf16.mxu0 %v492
    %703 = vmatpush1.bf16.msra.mxu0 %v491
    %704 = vmatprep.subr.bf16.mxu0 %v500
    %705 = vmatpush1.bf16.msra.mxu0 %v499
    %706 = vmatprep.subr.bf16.mxu0 %v508
    %707 = vmatpush1.bf16.msra.mxu0 %v507
    %708 = vmatprep.subr.bf16.mxu0 %v516
    %709 = vmatpush1.bf16.msra.mxu0 %v515
    %710 = vmatprep.subr.bf16.mxu0 %v524
    %711 = vmatpush1.bf16.msra.mxu0 %v523
    %712 = vmatprep.subr.bf16.mxu0 %v532
    %713 = vmatpush1.bf16.msra.mxu0 %v531
    %714 = vmatprep.subr.bf16.mxu0 %v540
    %715 = vmatpush1.bf16.msra.mxu0 %v539
    %716 = vmatprep.subr.bf16.mxu0 %v643
    %717 = vmatpush1.bf16.msra.mxu0 %v640
    %718 = vmatprep.subr.bf16.mxu0 0
    %719 = vmatpush1.bf16.msra.mxu0 0
    %720 = vmatprep.subr.bf16.mxu0 0
    %721 = vmatpush1.bf16.msra.mxu0 0
    %722 = vmatprep.subr.bf16.mxu0 0
    %723 = vmatpush1.bf16.msra.mxu0 0
    %724 = vmatprep.subr.bf16.mxu0 0
    %725 = vmatpush1.bf16.msra.mxu0 0
    %726 = vmatprep.subr.bf16.mxu0 0
    %727 = vmatpush1.bf16.msra.mxu0 0
    %728 = vmatprep.subr.bf16.mxu0 0
    %729 = vmatpush1.bf16.msra.mxu0 0
    %730 = vmatprep.mubr.bf16.mxu0 %v627
    %731 = vmatmul.mubr.bf16.gmra.mrb[0].mxu0 %v236
    %v732 = vpop.f32.mrb[0].mxu0
    %v733 = vadd.f32 0.0, %v732
    %v734 = vpop.f32.mrb[0].mxu0
    %v735 = vadd.f32 0.0, %v734
    %v736 = vpop.f32.mrb[0].mxu0
    %v737 = vpop.f32.mrb[0].mxu0
    %738 = vdwg.mxu0
    %739 = vmatprep.subr.bf16.mxu0 %v478
    %740 = vmatpush1.bf16.msra.mxu0 %v477
    %741 = vmatprep.subr.bf16.mxu0 %v486
    %742 = vmatpush1.bf16.msra.mxu0 %v485
    %743 = vmatprep.subr.bf16.mxu0 %v494
    %744 = vmatpush1.bf16.msra.mxu0 %v493
    %745 = vmatprep.subr.bf16.mxu0 %v502
    %746 = vmatpush1.bf16.msra.mxu0 %v501
    %747 = vmatprep.subr.bf16.mxu0 %v510
    %748 = vmatpush1.bf16.msra.mxu0 %v509
    %749 = vmatprep.subr.bf16.mxu0 %v518
    %750 = vmatpush1.bf16.msra.mxu0 %v517
    %751 = vmatprep.subr.bf16.mxu0 %v526
    %752 = vmatpush1.bf16.msra.mxu0 %v525
    %753 = vmatprep.subr.bf16.mxu0 %v534
    %754 = vmatpush1.bf16.msra.mxu0 %v533
    %755 = vmatprep.subr.bf16.mxu0 %v542
    %756 = vmatpush1.bf16.msra.mxu0 %v541
    %757 = vmatprep.subr.bf16.mxu0 %v649
    %758 = vmatpush1.bf16.msra.mxu0 %v646
    %759 = vmatprep.subr.bf16.mxu0 0
    %760 = vmatpush1.bf16.msra.mxu0 0
    %761 = vmatprep.subr.bf16.mxu0 0
    %762 = vmatpush1.bf16.msra.mxu0 0
    %763 = vmatprep.subr.bf16.mxu0 0
    %764 = vmatpush1.bf16.msra.mxu0 0
    %765 = vmatprep.subr.bf16.mxu0 0
    %766 = vmatpush1.bf16.msra.mxu0 0
    %767 = vmatprep.subr.bf16.mxu0 0
    %768 = vmatpush1.bf16.msra.mxu0 0
    %769 = vmatprep.subr.bf16.mxu0 0
    %770 = vmatpush1.bf16.msra.mxu0 0
    %771 = vmatprep.mubr.bf16.mxu0 %v627
    %772 = vmatmul.mubr.bf16.gmra.mrb[0].mxu0 %v236
    %v773 = vpop.f32.mrb[0].mxu0
    %v774 = vadd.f32 0.0, %v773
    %v775 = vpop.f32.mrb[0].mxu0
    %v776 = vadd.f32 0.0, %v775
    %v777 = vpop.f32.mrb[0].mxu0
    %v778 = vpop.f32.mrb[0].mxu0
    %779 = vdwg.mxu0
    %780 = vmatprep.subr.bf16.mxu0 %v480
    %781 = vmatpush1.bf16.msra.mxu0 %v479
    %782 = vmatprep.subr.bf16.mxu0 %v488
    %783 = vmatpush1.bf16.msra.mxu0 %v487
    %784 = vmatprep.subr.bf16.mxu0 %v496
    %785 = vmatpush1.bf16.msra.mxu0 %v495
    %786 = vmatprep.subr.bf16.mxu0 %v504
    %787 = vmatpush1.bf16.msra.mxu0 %v503
    %788 = vmatprep.subr.bf16.mxu0 %v512
    %789 = vmatpush1.bf16.msra.mxu0 %v511
    %790 = vmatprep.subr.bf16.mxu0 %v520
    %791 = vmatpush1.bf16.msra.mxu0 %v519
    %792 = vmatprep.subr.bf16.mxu0 %v528
    %793 = vmatpush1.bf16.msra.mxu0 %v527
    %794 = vmatprep.subr.bf16.mxu0 %v536
    %795 = vmatpush1.bf16.msra.mxu0 %v535
    %796 = vmatprep.subr.bf16.mxu0 %v544
    %797 = vmatpush1.bf16.msra.mxu0 %v543
    %798 = vmatprep.subr.bf16.mxu0 %v655
    %799 = vmatpush1.bf16.msra.mxu0 %v652
    %800 = vmatprep.subr.bf16.mxu0 0
    %801 = vmatpush1.bf16.msra.mxu0 0
    %802 = vmatprep.subr.bf16.mxu0 0
    %803 = vmatpush1.bf16.msra.mxu0 0
    %804 = vmatprep.subr.bf16.mxu0 0
    %805 = vmatpush1.bf16.msra.mxu0 0
    %806 = vmatprep.subr.bf16.mxu0 0
    %807 = vmatpush1.bf16.msra.mxu0 0
    %808 = vmatprep.subr.bf16.mxu0 0
    %809 = vmatpush1.bf16.msra.mxu0 0
    %810 = vmatprep.subr.bf16.mxu0 0
    %811 = vmatpush1.bf16.msra.mxu0 0
    %812 = vmatprep.mubr.bf16.mxu0 %v627
    %813 = vmatmul.mubr.bf16.gmra.mrb[0].mxu0 %v236
    %v814 = vpop.f32.mrb[0].mxu0
    %v815 = vadd.f32 0.0, %v814
    %v816 = vpop.f32.mrb[0].mxu0
    %v817 = vadd.f32 0.0, %v816
    %v818 = vpop.f32.mrb[0].mxu0
    %v819 = vpop.f32.mrb[0].mxu0
    %820 = vdwg.mxu0
    %v821 = vmax.f32 %v692, %v733
    %v822 = vmax.f32 %v694, %v735
    %v823 = vmax.f32 %v774, %v815
    %v824 = vmax.f32 %v776, %v817
    %v825 = vmax.f32 %v821, %v823
    %v826 = vmax.f32 %v822, %v824
    %v827 = vld [vmem:[#allocation4] sm:$0x3]
    %v829 = vlaneseq
    %v830 = vshrl.u32 %v829, 7
    %v831 = vsub.s32 0, %v830
    %v832 = vrot.slane %v827, %v831
    %v833 = vlaneseq
    %v834 = vshrl.u32 %v833, 7
    %v835 = vsub.s32 1, %v834
    %v836 = vrot.slane %v827, %v835
    %v839 = vadd.f32 %v825, %v832
    %v840 = vadd.f32 %v826, %v836
    %v841 = vmax.f32 %v839, 0.0
    %v842 = vmax.f32 %v840, 0.0
    %v843 = vpack.c.bf16 %v841, %v841
    %v844 = vpack.c.bf16 %v842, %v842
    %v845 = vld [vmem:[%s3] sm:$0xf]
    %v846 = vld [vmem:[%s3 + $0x4] sm:$0xf]
    %v847 = vld [vmem:[%s3 + $0x8] sm:$0xf]
    %v848 = vld [vmem:[%s3 + $0xc] sm:$0xf]
    %v849 = vld [vmem:[%s3 + $0x10] sm:$0xf]
    %v850 = vld [vmem:[%s3 + $0x14] sm:$0xf]
    %v851 = vld [vmem:[%s3 + $0x18] sm:$0xf]
    %v852 = vld [vmem:[%s3 + $0x1c] sm:$0xf]
    %v853 = vld [vmem:[%s3 + $0x20] sm:$0xf]
    %v854 = vld [vmem:[%s3 + $0x24] sm:$0xf]
    %v855 = vld [vmem:[%s3 + $0x28] sm:$0xf]
    %v856 = vld [vmem:[%s3 + $0x2c] sm:$0xf]
    %v857 = vld [vmem:[%s3 + $0x30] sm:$0xf]
    %v858 = vld [vmem:[%s3 + $0x34] sm:$0xf]
    %v859 = vld [vmem:[%s3 + $0x38] sm:$0xf]
    %v860 = vld [vmem:[%s3 + $0x3c] sm:$0xf]
    %v861 = vld [vmem:[%s3 + $0x40] sm:$0xf]
    %v862 = vld [vmem:[%s3 + $0x44] sm:$0xf]
    %v863 = vld [vmem:[%s3 + $0x48] sm:$0xf]
    %v864 = vld [vmem:[%s3 + $0x4c] sm:$0xf]
    %v865 = vld [vmem:[%s3 + $0x50] sm:$0xf]
    %v866 = vld [vmem:[%s3 + $0x54] sm:$0xf]
    %v867 = vld [vmem:[%s3 + $0x58] sm:$0xf]
    %v868 = vld [vmem:[%s3 + $0x5c] sm:$0xf]
    %v869 = vld [vmem:[%s3 + $0x60] sm:$0xf]
    %v870 = vld [vmem:[%s3 + $0x64] sm:$0xf]
    %v871 = vld [vmem:[%s3 + $0x68] sm:$0xf]
    %v872 = vld [vmem:[%s3 + $0x6c] sm:$0xf]
    %v873 = vld [vmem:[%s3 + $0x70] sm:$0xf]
    %v874 = vld [vmem:[%s3 + $0x74] sm:$0xf]
    %v875 = vld [vmem:[%s3 + $0x78] sm:$0xf]
    %v876 = vld [vmem:[%s3 + $0x7c] sm:$0xf]
    %v877 = vld [vmem:[#allocation6] sm:$0x1]
    %v879 = vlaneseq
    %v880 = vshrl.u32 %v879, 7
    %v881 = vsub.s32 0, %v880
    %v882 = vrot.slane %v877, %v881
    %v916 = vunpack.c.l.b16 %v845
    %v917 = vunpack.c.l.b16 %v846
    %v918 = vunpack.c.l.b16 %v847
    %v919 = vunpack.c.l.b16 %v848
    %v920 = vunpack.c.l.b16 %v849
    %v921 = vunpack.c.l.b16 %v850
    %v922 = vunpack.c.l.b16 %v851
    %v923 = vunpack.c.l.b16 %v852
    %v924 = vunpack.c.l.b16 %v853
    %v925 = vunpack.c.l.b16 %v854
    %v926 = vunpack.c.l.b16 %v855
    %v927 = vunpack.c.l.b16 %v856
    %v928 = vunpack.c.l.b16 %v857
    %v929 = vunpack.c.l.b16 %v858
    %v930 = vunpack.c.l.b16 %v859
    %v931 = vunpack.c.l.b16 %v860
    %v932 = vunpack.c.l.b16 %v861
    %v933 = vunpack.c.l.b16 %v862
    %v934 = vunpack.c.l.b16 %v863
    %v935 = vunpack.c.l.b16 %v864
    %v936 = vunpack.c.l.b16 %v865
    %v937 = vunpack.c.l.b16 %v866
    %v938 = vunpack.c.l.b16 %v867
    %v939 = vunpack.c.l.b16 %v868
    %v940 = vunpack.c.l.b16 %v869
    %v941 = vunpack.c.l.b16 %v870
    %v942 = vunpack.c.l.b16 %v871
    %v943 = vunpack.c.l.b16 %v872
    %v944 = vunpack.c.l.b16 %v873
    %v945 = vunpack.c.l.b16 %v874
    %v946 = vunpack.c.l.b16 %v875
    %v947 = vunpack.c.l.b16 %v876
    %v948 = vpack.c.b16 %v917, %v916
    %v949 = vpack.c.b16 %v919, %v918
    %v950 = vpack.c.b16 %v921, %v920
    %v951 = vpack.c.b16 %v923, %v922
    %v952 = vpack.c.b16 %v925, %v924
    %v953 = vpack.c.b16 %v927, %v926
    %v954 = vpack.c.b16 %v929, %v928
    %v955 = vpack.c.b16 %v931, %v930
    %v956 = vpack.c.b16 %v933, %v932
    %v957 = vpack.c.b16 %v935, %v934
    %v958 = vpack.c.b16 %v937, %v936
    %v959 = vpack.c.b16 %v939, %v938
    %v960 = vpack.c.b16 %v941, %v940
    %v961 = vpack.c.b16 %v943, %v942
    %v962 = vpack.c.b16 %v945, %v944
    %v963 = vpack.c.b16 %v947, %v946
    %980 = vmatprep.subr.bf16.mxu0 0
    %981 = vmatpush1.bf16.msra.mxu0 %v948
    %982 = vmatprep.subr.bf16.mxu0 0
    %983 = vmatpush1.bf16.msra.mxu0 %v949
    %984 = vmatprep.subr.bf16.mxu0 0
    %985 = vmatpush1.bf16.msra.mxu0 %v950
    %986 = vmatprep.subr.bf16.mxu0 0
    %987 = vmatpush1.bf16.msra.mxu0 %v951
    %988 = vmatprep.subr.bf16.mxu0 0
    %989 = vmatpush1.bf16.msra.mxu0 %v952
    %990 = vmatprep.subr.bf16.mxu0 0
    %991 = vmatpush1.bf16.msra.mxu0 %v953
    %992 = vmatprep.subr.bf16.mxu0 0
    %993 = vmatpush1.bf16.msra.mxu0 %v954
    %994 = vmatprep.subr.bf16.mxu0 0
    %995 = vmatpush1.bf16.msra.mxu0 %v955
    %996 = vmatprep.subr.bf16.mxu0 0
    %997 = vmatpush1.bf16.msra.mxu0 %v956
    %998 = vmatprep.subr.bf16.mxu0 0
    %999 = vmatpush1.bf16.msra.mxu0 %v957
    %1000 = vmatprep.subr.bf16.mxu0 0
    %1001 = vmatpush1.bf16.msra.mxu0 %v958
    %1002 = vmatprep.subr.bf16.mxu0 0
    %1003 = vmatpush1.bf16.msra.mxu0 %v959
    %1004 = vmatprep.subr.bf16.mxu0 0
    %1005 = vmatpush1.bf16.msra.mxu0 %v960
    %1006 = vmatprep.subr.bf16.mxu0 0
    %1007 = vmatpush1.bf16.msra.mxu0 %v961
    %1008 = vmatprep.subr.bf16.mxu0 0
    %1009 = vmatpush1.bf16.msra.mxu0 %v962
    %1010 = vmatprep.subr.bf16.mxu0 0
    %1011 = vmatpush1.bf16.msra.mxu0 %v963
    %1012 = vmatprep.mubr.bf16.mxu0 %v844
    %1013 = vmatmul.mubr.bf16.gmra.mrb[0].mxu0 %v843
    %v1014 = vpop.f32.mrb[0].mxu0
    %v1015 = vadd.f32 %v882, %v1014
    %v1016 = vpop.f32.mrb[0].mxu0
    %v1017 = vpop.f32.mrb[0].mxu0
    %v1018 = vpop.f32.mrb[0].mxu0
    %1019 = vdwg.mxu0
    %v1020 = vmax.f32 %v1015, 0.0
    %v1021 = vpack.c.bf16 %v1020, %v1020
    %v1022 = vld [vmem:[%s5] sm:$0xf]
    %v1023 = vld [vmem:[%s5 + $0x4] sm:$0xf]
    %v1024 = vld [vmem:[%s5 + $0x8] sm:$0xf]
    %v1025 = vld [vmem:[%s5 + $0xc] sm:$0xf]
    %v1026 = vld [vmem:[%s5 + $0x10] sm:$0xf]
    %v1027 = vld [vmem:[%s5 + $0x14] sm:$0xf]
    %v1028 = vld [vmem:[%s5 + $0x18] sm:$0xf]
    %v1029 = vld [vmem:[%s5 + $0x1c] sm:$0xf]
    %v1030 = vld [vmem:[%s5 + $0x20] sm:$0xf]
    %v1031 = vld [vmem:[%s5 + $0x24] sm:$0xf]
    %v1032 = vld [vmem:[%s5 + $0x28] sm:$0xf]
    %v1033 = vld [vmem:[%s5 + $0x2c] sm:$0xf]
    %v1034 = vld [vmem:[%s5 + $0x30] sm:$0xf]
    %v1035 = vld [vmem:[%s5 + $0x34] sm:$0xf]
    %v1036 = vld [vmem:[%s5 + $0x38] sm:$0xf]
    %v1037 = vld [vmem:[%s5 + $0x3c] sm:$0xf]
    %v1038 = vld [vmem:[#allocation7] sm:$0x1]
    %v1040 = vlaneseq
    %v1041 = vshrl.u32 %v1040, 7
    %v1042 = vsub.s32 0, %v1041
    %v1043 = vrot.slane %v1038, %v1042
    %v1061 = vunpack.c.l.b16 %v1022
    %v1062 = vunpack.c.l.b16 %v1023
    %v1063 = vunpack.c.l.b16 %v1024
    %v1064 = vunpack.c.l.b16 %v1025
    %v1065 = vunpack.c.l.b16 %v1026
    %v1066 = vunpack.c.l.b16 %v1027
    %v1067 = vunpack.c.l.b16 %v1028
    %v1068 = vunpack.c.l.b16 %v1029
    %v1069 = vunpack.c.l.b16 %v1030
    %v1070 = vunpack.c.l.b16 %v1031
    %v1071 = vunpack.c.l.b16 %v1032
    %v1072 = vunpack.c.l.b16 %v1033
    %v1073 = vunpack.c.l.b16 %v1034
    %v1074 = vunpack.c.l.b16 %v1035
    %v1075 = vunpack.c.l.b16 %v1036
    %v1076 = vunpack.c.l.b16 %v1037
    %v1077 = vpack.c.b16 %v1062, %v1061
    %v1078 = vpack.c.b16 %v1064, %v1063
    %v1079 = vpack.c.b16 %v1066, %v1065
    %v1080 = vpack.c.b16 %v1068, %v1067
    %v1081 = vpack.c.b16 %v1070, %v1069
    %v1082 = vpack.c.b16 %v1072, %v1071
    %v1083 = vpack.c.b16 %v1074, %v1073
    %v1084 = vpack.c.b16 %v1076, %v1075
    %1093 = vmatprep.subr.bf16.mxu0 0
    %1094 = vmatpush1.bf16.msra.mxu0 %v1077
    %1095 = vmatprep.subr.bf16.mxu0 0
    %1096 = vmatpush1.bf16.msra.mxu0 %v1078
    %1097 = vmatprep.subr.bf16.mxu0 0
    %1098 = vmatpush1.bf16.msra.mxu0 %v1079
    %1099 = vmatprep.subr.bf16.mxu0 0
    %1100 = vmatpush1.bf16.msra.mxu0 %v1080
    %1101 = vmatprep.subr.bf16.mxu0 0
    %1102 = vmatpush1.bf16.msra.mxu0 %v1081
    %1103 = vmatprep.subr.bf16.mxu0 0
    %1104 = vmatpush1.bf16.msra.mxu0 %v1082
    %1105 = vmatprep.subr.bf16.mxu0 0
    %1106 = vmatpush1.bf16.msra.mxu0 %v1083
    %1107 = vmatprep.subr.bf16.mxu0 0
    %1108 = vmatpush1.bf16.msra.mxu0 %v1084
    %1109 = vmatprep.subr.bf16.mxu0 0
    %1110 = vmatpush1.bf16.msra.mxu0 0
    %1111 = vmatprep.subr.bf16.mxu0 0
    %1112 = vmatpush1.bf16.msra.mxu0 0
    %1113 = vmatprep.subr.bf16.mxu0 0
    %1114 = vmatpush1.bf16.msra.mxu0 0
    %1115 = vmatprep.subr.bf16.mxu0 0
    %1116 = vmatpush1.bf16.msra.mxu0 0
    %1117 = vmatprep.subr.bf16.mxu0 0
    %1118 = vmatpush1.bf16.msra.mxu0 0
    %1119 = vmatprep.subr.bf16.mxu0 0
    %1120 = vmatpush1.bf16.msra.mxu0 0
    %1121 = vmatprep.subr.bf16.mxu0 0
    %1122 = vmatpush1.bf16.msra.mxu0 0
    %1123 = vmatprep.subr.bf16.mxu0 0
    %1124 = vmatpush1.bf16.msra.mxu0 0
    %1125 = vmatprep.mubr.bf16.mxu0 0
    %1126 = vmatmul.mubr.bf16.gmra.mrb[0].mxu0 %v1021
    %v1127 = vpop.f32.mrb[0].mxu0
    %v1128 = vadd.f32 %v1043, %v1127
    %v1129 = vpop.f32.mrb[0].mxu0
    %v1130 = vpop.f32.mrb[0].mxu0
    %v1131 = vpop.f32.mrb[0].mxu0
    %1132 = vdwg.mxu0
    %v1133 = vmax.f32 %v1128, 0.0
    %v1134 = vpack.c.bf16 %v1133, %v1133
    %v1135 = vld [vmem:[#allocation9] sm:$0xf]
    %v1136 = vld [vmem:[#allocation9 + $0x4] sm:$0xf]
    %v1137 = vld [vmem:[#allocation9 + $0x8] sm:$0xf]
    %v1138 = vld [vmem:[#allocation9 + $0xc] sm:$0xf]
    %v1139 = vld [vmem:[#allocation9 + $0x10] sm:$0xf]
    %v1140 = vld [vmem:[#allocation9 + $0x14] sm:$0xf]
    %v1141 = vld [vmem:[#allocation9 + $0x18] sm:$0xf]
    %v1142 = vld [vmem:[#allocation9 + $0x1c] sm:$0xf]
    %v1143 = vld [vmem:[#allocation10] sm:$0x1]
    %v1144 = vlaneseq
    %v1145 = vshrl.u32 %v1144, 7
    %v1146 = vsub.s32 0, %v1145
    %v1147 = vrot.slane %v1143, %v1146
    %v1156 = vunpack.c.l.b16 %v1135
    %v1157 = vunpack.c.l.b16 %v1136
    %v1158 = vunpack.c.l.b16 %v1137
    %v1159 = vunpack.c.l.b16 %v1138
    %v1160 = vunpack.c.l.b16 %v1139
    %v1161 = vunpack.c.l.b16 %v1140
    %v1162 = vunpack.c.l.b16 %v1141
    %v1163 = vunpack.c.l.b16 %v1142
    %v1164 = vpack.c.b16 %v1157, %v1156
    %v1165 = vpack.c.b16 %v1159, %v1158
    %v1166 = vpack.c.b16 %v1161, %v1160
    %v1167 = vpack.c.b16 %v1163, %v1162
    %vm1172 = vcmask 523264
    %v1174 = vsel %vm1172, %v1134, 0
    %1176 = vmatprep.subr.bf16.mxu0 0
    %1177 = vmatpush1.bf16.msra.mxu0 %v1164
    %1178 = vmatprep.subr.bf16.mxu0 0
    %1179 = vmatpush1.bf16.msra.mxu0 %v1165
    %1180 = vmatprep.subr.bf16.mxu0 0
    %1181 = vmatpush1.bf16.msra.mxu0 %v1166
    %1182 = vmatprep.subr.bf16.mxu0 0
    %1183 = vmatpush1.bf16.msra.mxu0 %v1167
    %1184 = vmatprep.subr.bf16.mxu0 0
    %1185 = vmatpush1.bf16.msra.mxu0 0
    %1186 = vmatprep.subr.bf16.mxu0 0
    %1187 = vmatpush1.bf16.msra.mxu0 0
    %1188 = vmatprep.subr.bf16.mxu0 0
    %1189 = vmatpush1.bf16.msra.mxu0 0
    %1190 = vmatprep.subr.bf16.mxu0 0
    %1191 = vmatpush1.bf16.msra.mxu0 0
    %1192 = vmatprep.subr.bf16.mxu0 0
    %1193 = vmatpush1.bf16.msra.mxu0 0
    %1194 = vmatprep.subr.bf16.mxu0 0
    %1195 = vmatpush1.bf16.msra.mxu0 0
    %1196 = vmatprep.subr.bf16.mxu0 0
    %1197 = vmatpush1.bf16.msra.mxu0 0
    %1198 = vmatprep.subr.bf16.mxu0 0
    %1199 = vmatpush1.bf16.msra.mxu0 0
    %1200 = vmatprep.subr.bf16.mxu0 0
    %1201 = vmatpush1.bf16.msra.mxu0 0
    %1202 = vmatprep.subr.bf16.mxu0 0
    %1203 = vmatpush1.bf16.msra.mxu0 0
    %1204 = vmatprep.subr.bf16.mxu0 0
    %1205 = vmatpush1.bf16.msra.mxu0 0
    %1206 = vmatprep.subr.bf16.mxu0 0
    %1207 = vmatpush1.bf16.msra.mxu0 0
    %1208 = vmatprep.mubr.bf16.mxu0 0
    %1209 = vmatmul.mubr.bf16.gmra.mrb[0].mxu0 %v1174
    %v1210 = vpop.f32.mrb[0].mxu0
    %v1211 = vadd.f32 %v1147, %v1210
    %v1212 = vpop.f32.mrb[0].mxu0
    %v1213 = vpop.f32.mrb[0].mxu0
    %v1214 = vpop.f32.mrb[0].mxu0
    %1215 = vdwg.mxu0
    %v1216 = vld [vmem:[#allocation10 + $0x1] sm:$0x1]
    %v1217 = vld [vmem:[#allocation10 + $0x2] sm:$0x1]
    %v1218 = vld [vmem:[%s11] sm:$0xff]
    %v1219 = vld [vmem:[%s11 + $0x8] sm:$0xff]
    %v1220 = vld [vmem:[%s11 + $0x10] sm:$0xff]
    %v1221 = vld [vmem:[%s11 + $0x18] sm:$0xff]
    %v1222 = vld [vmem:[%s11 + $0x20] sm:$0xff]
    %v1223 = vld [vmem:[%s11 + $0x28] sm:$0xff]
    %v1224 = vld [vmem:[%s11 + $0x30] sm:$0xff]
    %v1225 = vld [vmem:[%s11 + $0x38] sm:$0xff]
    %v1226 = vld [vmem:[%s11 + $0x40] sm:$0xff]
    %v1227 = vld [vmem:[%s11 + $0x48] sm:$0xff]
    %v1228 = vld [vmem:[%s11 + $0x50] sm:$0xff]
    %v1229 = vld [vmem:[%s11 + $0x58] sm:$0xff]
    %v1230 = vld [vmem:[%s11 + $0x60] sm:$0xff]
    %v1231 = vld [vmem:[%s11 + $0x68] sm:$0xff]
    %v1232 = vld [vmem:[%s11 + $0x70] sm:$0xff]
    %v1233 = vld [vmem:[%s11 + $0x78] sm:$0xff]
    %1234 = vmatprep.subr.mxu0 0.0
    %1235 = vmatpush1.msra.mxu0 %v1218
    %1236 = vmatprep.subr.mxu0 0.0
    %1237 = vmatpush1.msra.mxu0 %v1219
    %1238 = vmatprep.subr.mxu0 0.0
    %1239 = vmatpush1.msra.mxu0 %v1220
    %1240 = vmatprep.subr.mxu0 0.0
    %1241 = vmatpush1.msra.mxu0 %v1221
    %1242 = vmatprep.subr.mxu0 0.0
    %1243 = vmatpush1.msra.mxu0 %v1222
    %1244 = vmatprep.subr.mxu0 0.0
    %1245 = vmatpush1.msra.mxu0 %v1223
    %1246 = vmatprep.subr.mxu0 0.0
    %1247 = vmatpush1.msra.mxu0 %v1224
    %1248 = vmatprep.subr.mxu0 0.0
    %1249 = vmatpush1.msra.mxu0 %v1225
    %1250 = vmatprep.subr.mxu0 0.0
    %1251 = vmatpush1.msra.mxu0 %v1226
    %1252 = vmatprep.subr.mxu0 0.0
    %1253 = vmatpush1.msra.mxu0 %v1227
    %1254 = vmatprep.subr.mxu0 0.0
    %1255 = vmatpush1.msra.mxu0 %v1228
    %1256 = vmatprep.subr.mxu0 0.0
    %1257 = vmatpush1.msra.mxu0 %v1229
    %1258 = vmatprep.subr.mxu0 0.0
    %1259 = vmatpush1.msra.mxu0 %v1230
    %1260 = vmatprep.subr.mxu0 0.0
    %1261 = vmatpush1.msra.mxu0 %v1231
    %1262 = vmatprep.subr.mxu0 0.0
    %1263 = vmatpush1.msra.mxu0 %v1232
    %1264 = vmatprep.subr.mxu0 0.0
    %1265 = vmatpush1.msra.mxu0 %v1233
    %1266 = vmatprep.subr.mxu0 0.0
    %1267 = vmatpush1.msra.mxu0 0.0
    %1268 = vmatprep.subr.mxu0 0.0
    %1269 = vmatpush1.msra.mxu0 0.0
    %1270 = vmatprep.subr.mxu0 0.0
    %1271 = vmatpush1.msra.mxu0 0.0
    %1272 = vmatprep.subr.mxu0 0.0
    %1273 = vmatpush1.msra.mxu0 0.0
    %1274 = vmatprep.subr.mxu0 0.0
    %1275 = vmatpush1.msra.mxu0 0.0
    %1276 = vmatprep.subr.mxu0 0.0
    %1277 = vmatpush1.msra.mxu0 0.0
    %1278 = vmatprep.subr.mxu0 0.0
    %1279 = vmatpush1.msra.mxu0 0.0
    %1280 = vmatprep.subr.mxu0 0.0
    %1281 = vmatpush1.msra.mxu0 0.0
    %1282 = vmatprep.subr.mxu0 0.0
    %1283 = vmatpush1.msra.mxu0 0.0
    %1284 = vmatprep.subr.mxu0 0.0
    %1285 = vmatpush1.msra.mxu0 0.0
    %1286 = vmatprep.subr.mxu0 0.0
    %1287 = vmatpush1.msra.mxu0 0.0
    %1288 = vmatprep.subr.mxu0 0.0
    %1289 = vmatpush1.msra.mxu0 0.0
    %1290 = vmatprep.subr.mxu0 0.0
    %1291 = vmatpush1.msra.mxu0 0.0
    %1292 = vmatprep.subr.mxu0 0.0
    %1293 = vmatpush1.msra.mxu0 0.0
    %1294 = vmatprep.subr.mxu0 0.0
    %1295 = vmatpush1.msra.mxu0 0.0
    %1296 = vmatprep.subr.mxu0 0.0
    %1297 = vmatpush1.msra.mxu0 0.0
    %1298 = vmatprep.mubr.f32.mxu0 0.0
    %1299 = vmatmul.mubr.f32.gmra.mrb[0].mxu0 %v1211
    %v1300 = vpop.f32.mrb[0].mxu0
    %v1301 = vadd.f32 0.0, %v1300
    %v1302 = vpop.f32.mrb[0].mxu0
    %1303 = vdwg.mxu0
    %v1304 = vsub.f32 %v1211, %v1301
    %v1305 = vmul.f32 %v1304, %v1304
    %1306 = vmatprep.subr.mxu0 0.0
    %1307 = vmatpush1.msra.mxu0 %v1218
    %1308 = vmatprep.subr.mxu0 0.0
    %1309 = vmatpush1.msra.mxu0 %v1219
    %1310 = vmatprep.subr.mxu0 0.0
    %1311 = vmatpush1.msra.mxu0 %v1220
    %1312 = vmatprep.subr.mxu0 0.0
    %1313 = vmatpush1.msra.mxu0 %v1221
    %1314 = vmatprep.subr.mxu0 0.0
    %1315 = vmatpush1.msra.mxu0 %v1222
    %1316 = vmatprep.subr.mxu0 0.0
    %1317 = vmatpush1.msra.mxu0 %v1223
    %1318 = vmatprep.subr.mxu0 0.0
    %1319 = vmatpush1.msra.mxu0 %v1224
    %1320 = vmatprep.subr.mxu0 0.0
    %1321 = vmatpush1.msra.mxu0 %v1225
    %1322 = vmatprep.subr.mxu0 0.0
    %1323 = vmatpush1.msra.mxu0 %v1226
    %1324 = vmatprep.subr.mxu0 0.0
    %1325 = vmatpush1.msra.mxu0 %v1227
    %1326 = vmatprep.subr.mxu0 0.0
    %1327 = vmatpush1.msra.mxu0 %v1228
    %1328 = vmatprep.subr.mxu0 0.0
    %1329 = vmatpush1.msra.mxu0 %v1229
    %1330 = vmatprep.subr.mxu0 0.0
    %1331 = vmatpush1.msra.mxu0 %v1230
    %1332 = vmatprep.subr.mxu0 0.0
    %1333 = vmatpush1.msra.mxu0 %v1231
    %1334 = vmatprep.subr.mxu0 0.0
    %1335 = vmatpush1.msra.mxu0 %v1232
    %1336 = vmatprep.subr.mxu0 0.0
    %1337 = vmatpush1.msra.mxu0 %v1233
    %1338 = vmatprep.subr.mxu0 0.0
    %1339 = vmatpush1.msra.mxu0 0.0
    %1340 = vmatprep.subr.mxu0 0.0
    %1341 = vmatpush1.msra.mxu0 0.0
    %1342 = vmatprep.subr.mxu0 0.0
    %1343 = vmatpush1.msra.mxu0 0.0
    %1344 = vmatprep.subr.mxu0 0.0
    %1345 = vmatpush1.msra.mxu0 0.0
    %1346 = vmatprep.subr.mxu0 0.0
    %1347 = vmatpush1.msra.mxu0 0.0
    %1348 = vmatprep.subr.mxu0 0.0
    %1349 = vmatpush1.msra.mxu0 0.0
    %1350 = vmatprep.subr.mxu0 0.0
    %1351 = vmatpush1.msra.mxu0 0.0
    %1352 = vmatprep.subr.mxu0 0.0
    %1353 = vmatpush1.msra.mxu0 0.0
    %1354 = vmatprep.subr.mxu0 0.0
    %1355 = vmatpush1.msra.mxu0 0.0
    %1356 = vmatprep.subr.mxu0 0.0
    %1357 = vmatpush1.msra.mxu0 0.0
    %1358 = vmatprep.subr.mxu0 0.0
    %1359 = vmatpush1.msra.mxu0 0.0
    %1360 = vmatprep.subr.mxu0 0.0
    %1361 = vmatpush1.msra.mxu0 0.0
    %1362 = vmatprep.subr.mxu0 0.0
    %1363 = vmatpush1.msra.mxu0 0.0
    %1364 = vmatprep.subr.mxu0 0.0
    %1365 = vmatpush1.msra.mxu0 0.0
    %1366 = vmatprep.subr.mxu0 0.0
    %1367 = vmatpush1.msra.mxu0 0.0
    %1368 = vmatprep.subr.mxu0 0.0
    %1369 = vmatpush1.msra.mxu0 0.0
    %1370 = vmatprep.mubr.f32.mxu0 0.0
    %1371 = vmatmul.mubr.f32.gmra.mrb[0].mxu0 %v1305
    %v1372 = vpop.f32.mrb[0].mxu0
    %v1373 = vadd.f32 1e-05, %v1372
    %v1374 = vpop.f32.mrb[0].mxu0
    %1375 = vdwg.mxu0
    %v1376 = vrsqrt.pop %v1373
    %v1377 = vmul.f32 %v1304, %v1376
    %v1378 = vlaneseq
    %v1379 = vshrl.u32 %v1378, 7
    %v1380 = vsub.s32 0, %v1379
    %v1381 = vrot.slane %v1216, %v1380
    %v1382 = vmul.f32 %v1377, %v1381
    %v1383 = vlaneseq
    %v1384 = vshrl.u32 %v1383, 7
    %v1385 = vsub.s32 0, %v1384
    %v1386 = vrot.slane %v1217, %v1385
    %v1387 = vadd.f32 %v1382, %v1386
    %v1388 = vtanh.pop %v1387
    %v1389 = vpack.c.bf16 %v1388, %v1388
    %v1390 = vld [vmem:[%s9] sm:$0xf]
    %v1391 = vld [vmem:[%s9 + $0x4] sm:$0xf]
    %v1392 = vld [vmem:[%s9 + $0x8] sm:$0xf]
    %v1393 = vld [vmem:[%s9 + $0xc] sm:$0xf]
    %v1394 = vld [vmem:[%s9 + $0x10] sm:$0xf]
    %v1395 = vld [vmem:[%s9 + $0x14] sm:$0xf]
    %v1396 = vld [vmem:[%s9 + $0x18] sm:$0xf]
    %v1397 = vld [vmem:[%s9 + $0x1c] sm:$0xf]
    %v1398 = vld [vmem:[%s9 + $0x20] sm:$0xf]
    %v1399 = vld [vmem:[%s9 + $0x24] sm:$0xf]
    %v1400 = vld [vmem:[%s9 + $0x28] sm:$0xf]
    %v1401 = vld [vmem:[%s9 + $0x2c] sm:$0xf]
    %v1402 = vld [vmem:[%s9 + $0x30] sm:$0xf]
    %v1403 = vld [vmem:[%s9 + $0x34] sm:$0xf]
    %v1404 = vld [vmem:[%s9 + $0x38] sm:$0xf]
    %v1405 = vld [vmem:[%s9 + $0x3c] sm:$0xf]
    %v1406 = vld [vmem:[#allocation12] sm:$0x1]
    %v1407 = vlaneseq
    %v1408 = vshrl.u32 %v1407, 7
    %v1409 = vsub.s32 0, %v1408
    %v1410 = vrot.slane %v1406, %v1409
    %v1427 = vunpack.c.l.b16 %v1390
    %v1428 = vunpack.c.l.b16 %v1391
    %v1429 = vunpack.c.l.b16 %v1392
    %v1430 = vunpack.c.l.b16 %v1393
    %v1431 = vunpack.c.l.b16 %v1394
    %v1432 = vunpack.c.l.b16 %v1395
    %v1433 = vunpack.c.l.b16 %v1396
    %v1434 = vunpack.c.l.b16 %v1397
    %v1435 = vunpack.c.l.b16 %v1398
    %v1436 = vunpack.c.l.b16 %v1399
    %v1437 = vunpack.c.l.b16 %v1400
    %v1438 = vunpack.c.l.b16 %v1401
    %v1439 = vunpack.c.l.b16 %v1402
    %v1440 = vunpack.c.l.b16 %v1403
    %v1441 = vunpack.c.l.b16 %v1404
    %v1442 = vunpack.c.l.b16 %v1405
    %v1443 = vpack.c.b16 %v1428, %v1427
    %v1444 = vpack.c.b16 %v1430, %v1429
    %v1445 = vpack.c.b16 %v1432, %v1431
    %v1446 = vpack.c.b16 %v1434, %v1433
    %v1447 = vpack.c.b16 %v1436, %v1435
    %v1448 = vpack.c.b16 %v1438, %v1437
    %v1449 = vpack.c.b16 %v1440, %v1439
    %v1450 = vpack.c.b16 %v1442, %v1441
    %1459 = vmatprep.subr.bf16.mxu0 0
    %1460 = vmatpush1.bf16.msra.mxu0 %v1443
    %1461 = vmatprep.subr.bf16.mxu0 0
    %1462 = vmatpush1.bf16.msra.mxu0 %v1444
    %1463 = vmatprep.subr.bf16.mxu0 0
    %1464 = vmatpush1.bf16.msra.mxu0 %v1445
    %1465 = vmatprep.subr.bf16.mxu0 0
    %1466 = vmatpush1.bf16.msra.mxu0 %v1446
    %1467 = vmatprep.subr.bf16.mxu0 0
    %1468 = vmatpush1.bf16.msra.mxu0 %v1447
    %1469 = vmatprep.subr.bf16.mxu0 0
    %1470 = vmatpush1.bf16.msra.mxu0 %v1448
    %1471 = vmatprep.subr.bf16.mxu0 0
    %1472 = vmatpush1.bf16.msra.mxu0 %v1449
    %1473 = vmatprep.subr.bf16.mxu0 0
    %1474 = vmatpush1.bf16.msra.mxu0 %v1450
    %1475 = vmatprep.subr.bf16.mxu0 0
    %1476 = vmatpush1.bf16.msra.mxu0 0
    %1477 = vmatprep.subr.bf16.mxu0 0
    %1478 = vmatpush1.bf16.msra.mxu0 0
    %1479 = vmatprep.subr.bf16.mxu0 0
    %1480 = vmatpush1.bf16.msra.mxu0 0
    %1481 = vmatprep.subr.bf16.mxu0 0
    %1482 = vmatpush1.bf16.msra.mxu0 0
    %1483 = vmatprep.subr.bf16.mxu0 0
    %1484 = vmatpush1.bf16.msra.mxu0 0
    %1485 = vmatprep.subr.bf16.mxu0 0
    %1486 = vmatpush1.bf16.msra.mxu0 0
    %1487 = vmatprep.subr.bf16.mxu0 0
    %1488 = vmatpush1.bf16.msra.mxu0 0
    %1489 = vmatprep.subr.bf16.mxu0 0
    %1490 = vmatpush1.bf16.msra.mxu0 0
    %1491 = vmatprep.mubr.bf16.mxu0 0
    %1492 = vmatmul.mubr.bf16.gmra.mrb[0].mxu0 %v1389
    %v1493 = vpop.f32.mrb[0].mxu0
    %v1494 = vadd.f32 %v1410, %v1493
    %v1495 = vpop.f32.mrb[0].mxu0
    %v1496 = vpop.f32.mrb[0].mxu0
    %v1497 = vpop.f32.mrb[0].mxu0
    %1498 = vdwg.mxu0
    %v1499 = vld [vmem:[#allocation12 + $0x1] sm:$0x1]
    %v1500 = vld [vmem:[#allocation12 + $0x2] sm:$0x1]
    %v1501 = vld [vmem:[#allocation13] sm:$0xff]
    %v1502 = vld [vmem:[#allocation13 + $0x8] sm:$0xff]
    %v1503 = vld [vmem:[#allocation13 + $0x10] sm:$0xff]
    %v1504 = vld [vmem:[#allocation13 + $0x18] sm:$0xff]
    %v1505 = vld [vmem:[#allocation13 + $0x20] sm:$0xff]
    %v1506 = vld [vmem:[#allocation13 + $0x28] sm:$0xff]
    %v1507 = vld [vmem:[#allocation13 + $0x30] sm:$0xff]
    %v1508 = vld [vmem:[#allocation13 + $0x38] sm:$0xff]
    %v1509 = vld [vmem:[#allocation13 + $0x40] sm:$0xff]
    %v1510 = vld [vmem:[#allocation13 + $0x48] sm:$0xff]
    %v1511 = vld [vmem:[#allocation13 + $0x50] sm:$0xff]
    %v1512 = vld [vmem:[#allocation13 + $0x58] sm:$0xff]
    %v1513 = vld [vmem:[#allocation13 + $0x60] sm:$0xff]
    %v1514 = vld [vmem:[#allocation13 + $0x68] sm:$0xff]
    %v1515 = vld [vmem:[#allocation13 + $0x70] sm:$0xff]
    %v1516 = vld [vmem:[#allocation13 + $0x78] sm:$0xff]
    %1517 = vmatprep.subr.mxu0 0.0
    %1518 = vmatpush1.msra.mxu0 %v1501
    %1519 = vmatprep.subr.mxu0 0.0
    %1520 = vmatpush1.msra.mxu0 %v1502
    %1521 = vmatprep.subr.mxu0 0.0
    %1522 = vmatpush1.msra.mxu0 %v1503
    %1523 = vmatprep.subr.mxu0 0.0
    %1524 = vmatpush1.msra.mxu0 %v1504
    %1525 = vmatprep.subr.mxu0 0.0
    %1526 = vmatpush1.msra.mxu0 %v1505
    %1527 = vmatprep.subr.mxu0 0.0
    %1528 = vmatpush1.msra.mxu0 %v1506
    %1529 = vmatprep.subr.mxu0 0.0
    %1530 = vmatpush1.msra.mxu0 %v1507
    %1531 = vmatprep.subr.mxu0 0.0
    %1532 = vmatpush1.msra.mxu0 %v1508
    %1533 = vmatprep.subr.mxu0 0.0
    %1534 = vmatpush1.msra.mxu0 %v1509
    %1535 = vmatprep.subr.mxu0 0.0
    %1536 = vmatpush1.msra.mxu0 %v1510
    %1537 = vmatprep.subr.mxu0 0.0
    %1538 = vmatpush1.msra.mxu0 %v1511
    %1539 = vmatprep.subr.mxu0 0.0
    %1540 = vmatpush1.msra.mxu0 %v1512
    %1541 = vmatprep.subr.mxu0 0.0
    %1542 = vmatpush1.msra.mxu0 %v1513
    %1543 = vmatprep.subr.mxu0 0.0
    %1544 = vmatpush1.msra.mxu0 %v1514
    %1545 = vmatprep.subr.mxu0 0.0
    %1546 = vmatpush1.msra.mxu0 %v1515
    %1547 = vmatprep.subr.mxu0 0.0
    %1548 = vmatpush1.msra.mxu0 %v1516
    %1549 = vmatprep.subr.mxu0 0.0
    %1550 = vmatpush1.msra.mxu0 0.0
    %1551 = vmatprep.subr.mxu0 0.0
    %1552 = vmatpush1.msra.mxu0 0.0
    %1553 = vmatprep.subr.mxu0 0.0
    %1554 = vmatpush1.msra.mxu0 0.0
    %1555 = vmatprep.subr.mxu0 0.0
    %1556 = vmatpush1.msra.mxu0 0.0
    %1557 = vmatprep.subr.mxu0 0.0
    %1558 = vmatpush1.msra.mxu0 0.0
    %1559 = vmatprep.subr.mxu0 0.0
    %1560 = vmatpush1.msra.mxu0 0.0
    %1561 = vmatprep.subr.mxu0 0.0
    %1562 = vmatpush1.msra.mxu0 0.0
    %1563 = vmatprep.subr.mxu0 0.0
    %1564 = vmatpush1.msra.mxu0 0.0
    %1565 = vmatprep.subr.mxu0 0.0
    %1566 = vmatpush1.msra.mxu0 0.0
    %1567 = vmatprep.subr.mxu0 0.0
    %1568 = vmatpush1.msra.mxu0 0.0
    %1569 = vmatprep.subr.mxu0 0.0
    %1570 = vmatpush1.msra.mxu0 0.0
    %1571 = vmatprep.subr.mxu0 0.0
    %1572 = vmatpush1.msra.mxu0 0.0
    %1573 = vmatprep.subr.mxu0 0.0
    %1574 = vmatpush1.msra.mxu0 0.0
    %1575 = vmatprep.subr.mxu0 0.0
    %1576 = vmatpush1.msra.mxu0 0.0
    %1577 = vmatprep.subr.mxu0 0.0
    %1578 = vmatpush1.msra.mxu0 0.0
    %1579 = vmatprep.subr.mxu0 0.0
    %1580 = vmatpush1.msra.mxu0 0.0
    %1581 = vmatprep.mubr.f32.mxu0 0.0
    %1582 = vmatmul.mubr.f32.gmra.mrb[0].mxu0 %v1494
    %v1583 = vpop.f32.mrb[0].mxu0
    %v1584 = vadd.f32 0.0, %v1583
    %v1585 = vpop.f32.mrb[0].mxu0
    %1586 = vdwg.mxu0
    %v1587 = vsub.f32 %v1494, %v1584
    %v1588 = vmul.f32 %v1587, %v1587
    %1589 = vmatprep.subr.mxu0 0.0
    %1590 = vmatpush1.msra.mxu0 %v1501
    %1591 = vmatprep.subr.mxu0 0.0
    %1592 = vmatpush1.msra.mxu0 %v1502
    %1593 = vmatprep.subr.mxu0 0.0
    %1594 = vmatpush1.msra.mxu0 %v1503
    %1595 = vmatprep.subr.mxu0 0.0
    %1596 = vmatpush1.msra.mxu0 %v1504
    %1597 = vmatprep.subr.mxu0 0.0
    %1598 = vmatpush1.msra.mxu0 %v1505
    %1599 = vmatprep.subr.mxu0 0.0
    %1600 = vmatpush1.msra.mxu0 %v1506
    %1601 = vmatprep.subr.mxu0 0.0
    %1602 = vmatpush1.msra.mxu0 %v1507
    %1603 = vmatprep.subr.mxu0 0.0
    %1604 = vmatpush1.msra.mxu0 %v1508
    %1605 = vmatprep.subr.mxu0 0.0
    %1606 = vmatpush1.msra.mxu0 %v1509
    %1607 = vmatprep.subr.mxu0 0.0
    %1608 = vmatpush1.msra.mxu0 %v1510
    %1609 = vmatprep.subr.mxu0 0.0
    %1610 = vmatpush1.msra.mxu0 %v1511
    %1611 = vmatprep.subr.mxu0 0.0
    %1612 = vmatpush1.msra.mxu0 %v1512
    %1613 = vmatprep.subr.mxu0 0.0
    %1614 = vmatpush1.msra.mxu0 %v1513
    %1615 = vmatprep.subr.mxu0 0.0
    %1616 = vmatpush1.msra.mxu0 %v1514
    %1617 = vmatprep.subr.mxu0 0.0
    %1618 = vmatpush1.msra.mxu0 %v1515
    %1619 = vmatprep.subr.mxu0 0.0
    %1620 = vmatpush1.msra.mxu0 %v1516
    %1621 = vmatprep.subr.mxu0 0.0
    %1622 = vmatpush1.msra.mxu0 0.0
    %1623 = vmatprep.subr.mxu0 0.0
    %1624 = vmatpush1.msra.mxu0 0.0
    %1625 = vmatprep.subr.mxu0 0.0
    %1626 = vmatpush1.msra.mxu0 0.0
    %1627 = vmatprep.subr.mxu0 0.0
    %1628 = vmatpush1.msra.mxu0 0.0
    %1629 = vmatprep.subr.mxu0 0.0
    %1630 = vmatpush1.msra.mxu0 0.0
    %1631 = vmatprep.subr.mxu0 0.0
    %1632 = vmatpush1.msra.mxu0 0.0
    %1633 = vmatprep.subr.mxu0 0.0
    %1634 = vmatpush1.msra.mxu0 0.0
    %1635 = vmatprep.subr.mxu0 0.0
    %1636 = vmatpush1.msra.mxu0 0.0
    %1637 = vmatprep.subr.mxu0 0.0
    %1638 = vmatpush1.msra.mxu0 0.0
    %1639 = vmatprep.subr.mxu0 0.0
    %1640 = vmatpush1.msra.mxu0 0.0
    %1641 = vmatprep.subr.mxu0 0.0
    %1642 = vmatpush1.msra.mxu0 0.0
    %1643 = vmatprep.subr.mxu0 0.0
    %1644 = vmatpush1.msra.mxu0 0.0
    %1645 = vmatprep.subr.mxu0 0.0
    %1646 = vmatpush1.msra.mxu0 0.0
    %1647 = vmatprep.subr.mxu0 0.0
    %1648 = vmatpush1.msra.mxu0 0.0
    %1649 = vmatprep.subr.mxu0 0.0
    %1650 = vmatpush1.msra.mxu0 0.0
    %1651 = vmatprep.subr.mxu0 0.0
    %1652 = vmatpush1.msra.mxu0 0.0
    %1653 = vmatprep.mubr.f32.mxu0 0.0
    %1654 = vmatmul.mubr.f32.gmra.mrb[0].mxu0 %v1588
    %v1655 = vpop.f32.mrb[0].mxu0
    %v1656 = vadd.f32 1e-05, %v1655
    %v1657 = vpop.f32.mrb[0].mxu0
    %1658 = vdwg.mxu0
    %v1659 = vrsqrt.pop %v1656
    %v1660 = vmul.f32 %v1587, %v1659
    %v1661 = vlaneseq
    %v1662 = vshrl.u32 %v1661, 7
    %v1663 = vsub.s32 0, %v1662
    %v1664 = vrot.slane %v1499, %v1663
    %v1665 = vmul.f32 %v1660, %v1664
    %v1666 = vlaneseq
    %v1667 = vshrl.u32 %v1666, 7
    %v1668 = vsub.s32 0, %v1667
    %v1669 = vrot.slane %v1500, %v1668
    %v1670 = vadd.f32 %v1665, %v1669
    %v1671 = vlaneseq
    %v1672 = vand.u32 %v1671, 127
    %vm1673 = vcmp.lt.s32.totalorder %v1672, 7
    %v1674 = vsel %vm1673, 1, 0
    %vm1675 = vcmp.eq.s32.totalorder %v1674, 1
    %v1676 = vsel %vm1675, %v1670, -1e+30
    %v1677 = vsel %vm630, %v1676, -inf
    %1678 = vmax.xlane.f32.xlu0 %v1677
    %v1679 = vpop.xlane.xlu0 %1678
    %v1680 = vsub.f32 %v1670, %v1679
    %v1681 = vmul.f32 %v1680, 1.442695
    %v1682 = vpow.pop %v1681
    %v1683 = vsel %vm1675, %v1682, 0.0
    %v1684 = vsel %vm630, %v1683, 0.0
    %1685 = vadd.xlane.f32.xlu0 %v1684
    %v1686 = vpop.xlane.xlu0 %1685
    %v1687 = vlog2.pop %v1686
    %v1688 = vmul.f32 %v1687, 0.6931472
    %v1689 = vsub.f32 %v1680, %v1688
    %v1690 = vsel %vm1675, %v1689, %v1670
    %1691 = vst [vmem:[%s13] sm:$0x3] %v1690
    // Predicated region
    $region86: #{forward.1} parent=1 // pred_check
      _
    $region87: #{forward.1} parent=1 // pred_check_branch
      %1693 = sbr.rel (0) target = $region89
    $region88: #{forward.1} parent=1 // pred_region
      _
    $region89: #{forward.1} parent=1 // pred_fallthru
      _
    // Predicated region
    $region90: #{forward.1} parent=1 // pred_check
      _
    $region91: #{forward.1} parent=1 // pred_check_branch
      %1695 = sbr.rel (0) target = $region93
    $region92: #{forward.1} parent=1 // pred_region
      _
    $region93: #{forward.1} parent=1 // pred_fallthru
      _
    %1696 = vsyncpa [#allocation3], 1
    %1697 = vsyncpa [#allocation5], 1
    %1698 = vsyncpa [#allocation8], 1
    %1699 = vsyncpa [#allocation11], 1
    %1700 = vsyncpa [#allocation14], 1

</llo_original>
